<compile_context>
chip_gen: v7x
topology: tpu7x:2x2x1
jax: 0.10.0
libtpu: 0.0.40
codegen_flags: <defaults>
</compile_context>

<pallas_src>
import math

import jax
import jax.numpy as jnp
from jax.experimental import pallas as pl
from jax.experimental.pallas import tpu as pltpu

# ----------------- small, lane-dense configuration -----------------
D_MODEL = 128            # d_model (lane-dense: multiple of 128)
NHEAD = 4
HEAD_DIM = D_MODEL // NHEAD
SEQ = 16                 # sequence length (multiple of 8 sublanes)
BATCH = 2
LN_EPS = 1e-5
F32 = jnp.float32
BF16 = jnp.bfloat16


def _make_kernel(batch, seq):
    """Kernel closure over static batch / seq sizes."""

    def kernel(tgt_ref, pos_ref, w_ref, vec_ref, out_ref):
        """Whole layer, all batches, in one invocation.

        tgt_ref : (B*L, C) f32
        pos_ref : (B*L, C) f32
        w_ref   : (C, 4C) bf16   columns = [Wq*scale | Wk | Wv | Wo], (in,out) layout
        vec_ref : (8, C)  f32    rows    = [bq*scale, bk, bv, bo, ln_g, ln_b, 0, 0]
        out_ref : (B*L, C) f32
        """
        c = D_MODEL
        x = tgt_ref[...]                      # (B*L, C) f32
        xpe = x + pos_ref[...]                # q/k use pos-embedded tokens, v uses raw tgt

        W = w_ref[...]                        # (C, 4C) bf16
        bq = vec_ref[0:1, :]
        bk = vec_ref[1:2, :]
        bv = vec_ref[2:3, :]
        bo = vec_ref[3:4, :]
        ln_g = vec_ref[4:5, :]
        ln_b = vec_ref[5:6, :]

        xpe_b = xpe.astype(BF16)
        x_b = x.astype(BF16)

        # Fused q/k projection: one (B*L,C)@(C,2C) MXU op; scale pre-folded into Wq/bq.
        qk = jnp.dot(xpe_b, W[:, : 2 * c], preferred_element_type=F32)      # (B*L, 2C)
        q = (qk[:, :c] + bq).astype(BF16)                                   # (B*L, C)
        k = (qk[:, c:] + bk).astype(BF16)                                   # (B*L, C)
        v = (jnp.dot(x_b, W[:, 2 * c: 3 * c],
                     preferred_element_type=F32) + bv).astype(BF16)         # (B*L, C)
        wo = W[:, 3 * c:]                                                   # (C, C) bf16

        # Accumulator init carries the output-projection bias (hoisted broadcast).
        bo_full = jnp.broadcast_to(bo, (seq, c))                            # (L, C) f32

        out_blocks = []
        for b in range(batch):                 # static unroll (small B)
            r0 = b * seq
            q_b = q[r0:r0 + seq, :]
            k_b = k[r0:r0 + seq, :]
            v_b = v[r0:r0 + seq, :]
            acc = bo_full
            for h in range(NHEAD):             # static unroll over heads
                s0 = h * HEAD_DIM
                q_h = q_b[:, s0:s0 + HEAD_DIM]                               # (L, hd)
                k_h = k_b[:, s0:s0 + HEAD_DIM]                               # (L, hd)
                v_h = v_b[:, s0:s0 + HEAD_DIM]                               # (L, hd)
                # scores = (q_h * scale_folded) @ k_h^T
                scores = jax.lax.dot_general(q_h, k_h, (((1,), (1,)), ((), ())),
                                             preferred_element_type=F32)    # (L, L)
                m = jnp.max(scores, axis=-1, keepdims=True)
                e = jnp.exp(scores - m)
                p = e / jnp.sum(e, axis=-1, keepdims=True)                   # exact softmax
                ctx = jnp.dot(p.astype(BF16), v_h, preferred_element_type=F32)  # (L, hd)
                # Fold this head's slice of the output projection -> no lane concat.
                acc = acc + jnp.dot(ctx.astype(BF16), wo[s0:s0 + HEAD_DIM, :],
                                    preferred_element_type=F32)              # (L, C)
            out_blocks.append(acc)
        attn = jnp.concatenate(out_blocks, axis=0)        # cheap sublane concat (B*L, C)

        # residual + LayerNorm (f32); dropout p=0 -> identity
        y = x + attn
        mu = jnp.mean(y, axis=-1, keepdims=True)
        yc = y - mu
        var = jnp.mean(yc * yc, axis=-1, keepdims=True)
        y = yc * jax.lax.rsqrt(var + LN_EPS)
        out_ref[...] = y * ln_g + ln_b          # single lane-dense (B*L, 128) store

    return kernel


def init_params(key):
    k1, k2 = jax.random.split(key)

    def xavier(k, shape):
        fan_out, fan_in = shape
        bound = math.sqrt(6.0 / (fan_in + fan_out))
        return jax.random.uniform(k, shape, F32, -bound, bound)

    return {
        "in_proj_weight": xavier(k1, (3 * D_MODEL, D_MODEL)),   # torch (out, in)
        "in_proj_bias": jnp.zeros((3 * D_MODEL,), F32),
        "out_proj_weight": xavier(k2, (D_MODEL, D_MODEL)),      # torch (out, in)
        "out_proj_bias": jnp.zeros((D_MODEL,), F32),
        "ln_weight": jnp.ones((D_MODEL,), F32),
        "ln_bias": jnp.zeros((D_MODEL,), F32),
    }


def pack_params(params):
    """ONE-TIME packing of torch-layout params into kernel slabs (hoisted out
    of the per-call path). Returns (w_slab bf16 (C,4C), vec_slab f32 (8,C))."""
    c = D_MODEL
    scale = 1.0 / math.sqrt(HEAD_DIM)
    wq, wk, wv = jnp.split(params["in_proj_weight"], 3, axis=0)   # (C,C) each, (out,in)
    w_slab = jnp.concatenate(
        [wq.T * scale, wk.T, wv.T, params["out_proj_weight"].T], axis=1).astype(BF16)
    bq, bk, bv = jnp.split(params["in_proj_bias"], 3)
    zero = jnp.zeros((c,), F32)
    vec_slab = jnp.stack([bq * scale, bk, bv, params["out_proj_bias"],
                          params["ln_weight"], params["ln_bias"], zero, zero], axis=0)
    return jax.device_put(w_slab), jax.device_put(vec_slab)


@jax.jit
def self_attention_layer(w_slab, vec_slab, tgt, query_pos=None):
    b, l, c = tgt.shape
    assert (b, l, c) == (BATCH, SEQ, D_MODEL)
    pos = query_pos if query_pos is not None else jnp.zeros_like(tgt)

    # Flatten batch into rows (free reshape) -> single kernel invocation.
    tgt2 = tgt.reshape(b * l, c)
    pos2 = pos.reshape(b * l, c)

    out = pl.pallas_call(
        _make_kernel(b, l),
        out_shape=jax.ShapeDtypeStruct((b * l, c), F32),
        grid=(1,),
        in_specs=[
            pl.BlockSpec((b * l, c), lambda i: (0, 0)),
            pl.BlockSpec((b * l, c), lambda i: (0, 0)),
            pl.BlockSpec((c, 4 * c), lambda i: (0, 0)),
            pl.BlockSpec((8, c), lambda i: (0, 0)),
        ],
        out_specs=pl.BlockSpec((b * l, c), lambda i: (0, 0)),
        compiler_params=pltpu.CompilerParams(
            dimension_semantics=("arbitrary",)),
    )(tgt2, pos2, w_slab, vec_slab)
    return out.reshape(b, l, c)


def self_attention_reference(params, tgt, query_pos):
    """Pure-JAX f32 reference of SelfAttentionLayer.forward_post."""
    b, l, c = tgt.shape
    xpe = tgt + query_pos
    wq, wk, wv = jnp.split(params["in_proj_weight"], 3, axis=0)
    bq, bk, bv = jnp.split(params["in_proj_bias"], 3)
    q = xpe @ wq.T + bq
    k = xpe @ wk.T + bk
    v = tgt @ wv.T + bv

    def heads(t):
        return t.reshape(b, l, NHEAD, HEAD_DIM).transpose(0, 2, 1, 3)

    qh, kh, vh = heads(q), heads(k), heads(v)
    scores = jnp.einsum("bhqd,bhkd->bhqk", qh, kh) / math.sqrt(HEAD_DIM)
    p = jax.nn.softmax(scores, axis=-1)
    ctx = jnp.einsum("bhqk,bhkd->bhqd", p, vh).transpose(0, 2, 1, 3).reshape(b, l, c)
    attn = ctx @ params["out_proj_weight"].T + params["out_proj_bias"]
    y = tgt + attn
    mu = y.mean(-1, keepdims=True)
    var = ((y - mu) ** 2).mean(-1, keepdims=True)
    y = (y - mu) / jnp.sqrt(var + LN_EPS)
    return y * params["ln_weight"] + params["ln_bias"]


if __name__ == "__main__":
    key = jax.random.PRNGKey(0)
    kp, kt, kq = jax.random.split(key, 3)
    params = init_params(kp)

    # One-time packing (hoisted out of the forward path).
    w_slab, vec_slab = pack_params(params)

    tgt = jax.random.normal(kt, (BATCH, SEQ, D_MODEL), dtype=F32)
    query_pos = jax.random.normal(kq, (BATCH, SEQ, D_MODEL), dtype=F32)

    out = self_attention_layer(w_slab, vec_slab, tgt, query_pos)
    jax.block_until_ready(out)

    assert out.shape == (BATCH, SEQ, D_MODEL), out.shape
    assert bool(jnp.all(jnp.isfinite(out)))

    ref = self_attention_reference(params, tgt, query_pos)
    max_err = float(jnp.max(jnp.abs(out - ref)))
    # bf16 weight quantisation + bf16 MXU operands bound max error ~1e-2..3e-2.
    assert max_err < 5e-2, f"max abs error vs f32 reference: {max_err}"
    print("KERNEL_OK")
</pallas_src>

<mosaic_0001>
module attributes {stable_mosaic.version = 11 : i64} {
  func.func @kernel(%arg0: i32, %arg1: memref<32x128xf32, #tpu.memory_space<vmem>>, %arg2: memref<32x128xf32, #tpu.memory_space<vmem>>, %arg3: memref<128x512xbf16, #tpu.memory_space<vmem>>, %arg4: memref<8x128xf32, #tpu.memory_space<vmem>>, %arg5: memref<32x128xf32, #tpu.memory_space<vmem>>) attributes {dimension_semantics = [#tpu.dimension_semantics<arbitrary>], iteration_bounds = array<i64: 1>, scalar_prefetch = 0 : i64, scratch_operands = 0 : i64, tpu.core_type = #tpu.core_type<tc>, window_params = [{pipeline_mode = #tpu.pipeline_mode<synchronous>, transform_indices = @transform_0, window_bounds = array<i64: 32, 128>}, {pipeline_mode = #tpu.pipeline_mode<synchronous>, transform_indices = @transform_1, window_bounds = array<i64: 32, 128>}, {pipeline_mode = #tpu.pipeline_mode<synchronous>, transform_indices = @transform_2, window_bounds = array<i64: 128, 512>}, {pipeline_mode = #tpu.pipeline_mode<synchronous>, transform_indices = @transform_3, window_bounds = array<i64: 8, 128>}, {pipeline_mode = #tpu.pipeline_mode<synchronous>, transform_indices = @transform_4, window_bounds = array<i64: 32, 128>}]} {
    %c0 = arith.constant 0 : index
    %c0_0 = arith.constant 0 : index
    %0 = vector.load %arg1[%c0, %c0_0] : memref<32x128xf32, #tpu.memory_space<vmem>>, vector<32x128xf32>
    %c0_1 = arith.constant 0 : index
    %c0_2 = arith.constant 0 : index
    %1 = vector.load %arg2[%c0_1, %c0_2] : memref<32x128xf32, #tpu.memory_space<vmem>>, vector<32x128xf32>
    %2 = arith.addf %0, %1 : vector<32x128xf32>
    %c0_3 = arith.constant 0 : index
    %c0_4 = arith.constant 0 : index
    %3 = vector.load %arg3[%c0_3, %c0_4] : memref<128x512xbf16, #tpu.memory_space<vmem>>, vector<128x512xbf16>
    %c0_5 = arith.constant 0 : index
    %c0_6 = arith.constant 0 : index
    %4 = vector.load %arg4[%c0_5, %c0_6] : memref<8x128xf32, #tpu.memory_space<vmem>>, vector<1x128xf32>
    %c1 = arith.constant 1 : index
    %c0_7 = arith.constant 0 : index
    %5 = vector.load %arg4[%c1, %c0_7] : memref<8x128xf32, #tpu.memory_space<vmem>>, vector<1x128xf32>
    %c2 = arith.constant 2 : index
    %c0_8 = arith.constant 0 : index
    %6 = vector.load %arg4[%c2, %c0_8] : memref<8x128xf32, #tpu.memory_space<vmem>>, vector<1x128xf32>
    %c3 = arith.constant 3 : index
    %c0_9 = arith.constant 0 : index
    %7 = vector.load %arg4[%c3, %c0_9] : memref<8x128xf32, #tpu.memory_space<vmem>>, vector<1x128xf32>
    %c4 = arith.constant 4 : index
    %c0_10 = arith.constant 0 : index
    %8 = vector.load %arg4[%c4, %c0_10] : memref<8x128xf32, #tpu.memory_space<vmem>>, vector<1x128xf32>
    %c5 = arith.constant 5 : index
    %c0_11 = arith.constant 0 : index
    %9 = vector.load %arg4[%c5, %c0_11] : memref<8x128xf32, #tpu.memory_space<vmem>>, vector<1x128xf32>
    %10 = arith.truncf %2 : vector<32x128xf32> to vector<32x128xbf16>
    %11 = arith.truncf %0 : vector<32x128xf32> to vector<32x128xbf16>
    %12 = vector.extract_strided_slice %3 {offsets = [0, 0], sizes = [128, 256], strides = [1, 1]} : vector<128x512xbf16> to vector<128x256xbf16>
    %cst = arith.constant dense<0.000000e+00> : vector<32x256xf32>
    %13 = tpu.matmul %10, %12, %cst {dimension_numbers = #tpu.dot_dimension_numbers<[1], [0], [0], [1], [0, 0, 1, 1], [], []>} : vector<32x128xbf16>, vector<128x256xbf16>, vector<32x256xf32> -> vector<32x256xf32>
    %14 = vector.extract_strided_slice %13 {offsets = [0, 0], sizes = [32, 128], strides = [1, 1]} : vector<32x256xf32> to vector<32x128xf32>
    %15 = vector.broadcast %4 : vector<1x128xf32> to vector<32x128xf32>
    %16 = arith.addf %14, %15 : vector<32x128xf32>
    %17 = arith.truncf %16 : vector<32x128xf32> to vector<32x128xbf16>
    %18 = vector.extract_strided_slice %13 {offsets = [0, 128], sizes = [32, 128], strides = [1, 1]} : vector<32x256xf32> to vector<32x128xf32>
    %19 = vector.broadcast %5 : vector<1x128xf32> to vector<32x128xf32>
    %20 = arith.addf %18, %19 : vector<32x128xf32>
    %21 = arith.truncf %20 : vector<32x128xf32> to vector<32x128xbf16>
    %22 = vector.extract_strided_slice %3 {offsets = [0, 256], sizes = [128, 128], strides = [1, 1]} : vector<128x512xbf16> to vector<128x128xbf16>
    %cst_12 = arith.constant dense<0.000000e+00> : vector<32x128xf32>
    %23 = tpu.matmul %11, %22, %cst_12 {dimension_numbers = #tpu.dot_dimension_numbers<[1], [0], [0], [1], [0, 0, 1, 1], [], []>} : vector<32x128xbf16>, vector<128x128xbf16>, vector<32x128xf32> -> vector<32x128xf32>
    %24 = vector.broadcast %6 : vector<1x128xf32> to vector<32x128xf32>
    %25 = arith.addf %23, %24 : vector<32x128xf32>
    %26 = arith.truncf %25 : vector<32x128xf32> to vector<32x128xbf16>
    %27 = vector.extract_strided_slice %3 {offsets = [0, 384], sizes = [128, 128], strides = [1, 1]} : vector<128x512xbf16> to vector<128x128xbf16>
    %28 = vector.shape_cast %7 : vector<1x128xf32> to vector<1x128xf32>
    %29 = vector.broadcast %28 : vector<1x128xf32> to vector<16x128xf32>
    %30 = vector.extract_strided_slice %17 {offsets = [0, 0], sizes = [16, 128], strides = [1, 1]} : vector<32x128xbf16> to vector<16x128xbf16>
    %31 = vector.extract_strided_slice %21 {offsets = [0, 0], sizes = [16, 128], strides = [1, 1]} : vector<32x128xbf16> to vector<16x128xbf16>
    %32 = vector.extract_strided_slice %26 {offsets = [0, 0], sizes = [16, 128], strides = [1, 1]} : vector<32x128xbf16> to vector<16x128xbf16>
    %33 = vector.extract_strided_slice %30 {offsets = [0, 0], sizes = [16, 32], strides = [1, 1]} : vector<16x128xbf16> to vector<16x32xbf16>
    %34 = vector.extract_strided_slice %31 {offsets = [0, 0], sizes = [16, 32], strides = [1, 1]} : vector<16x128xbf16> to vector<16x32xbf16>
    %35 = vector.extract_strided_slice %32 {offsets = [0, 0], sizes = [16, 32], strides = [1, 1]} : vector<16x128xbf16> to vector<16x32xbf16>
    %cst_13 = arith.constant dense<0.000000e+00> : vector<16x16xf32>
    %36 = tpu.matmul %33, %34, %cst_13 {dimension_numbers = #tpu.dot_dimension_numbers<[1], [1], [0], [0], [0, 0, 1, 0], [], []>} : vector<16x32xbf16>, vector<16x32xbf16>, vector<16x16xf32> -> vector<16x16xf32>
    %cst_14 = arith.constant dense<0xFF800000> : vector<16xf32>
    %37 = vector.multi_reduction <maximumf>, %36, %cst_14 [1] : vector<16x16xf32> to vector<16xf32>
    %38 = vector.shape_cast %37 : vector<16xf32> to vector<16x1xf32>
    %39 = vector.broadcast %38 : vector<16x1xf32> to vector<16x16xf32>
    %40 = arith.subf %36, %39 : vector<16x16xf32>
    %41 = math.exp %40 : vector<16x16xf32>
    %cst_15 = arith.constant dense<0.000000e+00> : vector<16xf32>
    %42 = vector.multi_reduction <add>, %41, %cst_15 [1] : vector<16x16xf32> to vector<16xf32>
    %43 = vector.shape_cast %42 : vector<16xf32> to vector<16x1xf32>
    %44 = vector.broadcast %43 : vector<16x1xf32> to vector<16x16xf32>
    %45 = arith.divf %41, %44 : vector<16x16xf32>
    %46 = arith.truncf %45 : vector<16x16xf32> to vector<16x16xbf16>
    %cst_16 = arith.constant dense<0.000000e+00> : vector<16x32xf32>
    %47 = tpu.matmul %46, %35, %cst_16 {dimension_numbers = #tpu.dot_dimension_numbers<[1], [0], [0], [1], [0, 0, 1, 1], [], []>} : vector<16x16xbf16>, vector<16x32xbf16>, vector<16x32xf32> -> vector<16x32xf32>
    %48 = arith.truncf %47 : vector<16x32xf32> to vector<16x32xbf16>
    %49 = vector.extract_strided_slice %27 {offsets = [0, 0], sizes = [32, 128], strides = [1, 1]} : vector<128x128xbf16> to vector<32x128xbf16>
    %cst_17 = arith.constant dense<0.000000e+00> : vector<16x128xf32>
    %50 = tpu.matmul %48, %49, %cst_17 {dimension_numbers = #tpu.dot_dimension_numbers<[1], [0], [0], [1], [0, 0, 1, 1], [], []>} : vector<16x32xbf16>, vector<32x128xbf16>, vector<16x128xf32> -> vector<16x128xf32>
    %51 = arith.addf %29, %50 : vector<16x128xf32>
    %52 = vector.extract_strided_slice %30 {offsets = [0, 32], sizes = [16, 32], strides = [1, 1]} : vector<16x128xbf16> to vector<16x32xbf16>
    %53 = vector.extract_strided_slice %31 {offsets = [0, 32], sizes = [16, 32], strides = [1, 1]} : vector<16x128xbf16> to vector<16x32xbf16>
    %54 = vector.extract_strided_slice %32 {offsets = [0, 32], sizes = [16, 32], strides = [1, 1]} : vector<16x128xbf16> to vector<16x32xbf16>
    %cst_18 = arith.constant dense<0.000000e+00> : vector<16x16xf32>
    %55 = tpu.matmul %52, %53, %cst_18 {dimension_numbers = #tpu.dot_dimension_numbers<[1], [1], [0], [0], [0, 0, 1, 0], [], []>} : vector<16x32xbf16>, vector<16x32xbf16>, vector<16x16xf32> -> vector<16x16xf32>
    %cst_19 = arith.constant dense<0xFF800000> : vector<16xf32>
    %56 = vector.multi_reduction <maximumf>, %55, %cst_19 [1] : vector<16x16xf32> to vector<16xf32>
    %57 = vector.shape_cast %56 : vector<16xf32> to vector<16x1xf32>
    %58 = vector.broadcast %57 : vector<16x1xf32> to vector<16x16xf32>
    %59 = arith.subf %55, %58 : vector<16x16xf32>
    %60 = math.exp %59 : vector<16x16xf32>
    %cst_20 = arith.constant dense<0.000000e+00> : vector<16xf32>
    %61 = vector.multi_reduction <add>, %60, %cst_20 [1] : vector<16x16xf32> to vector<16xf32>
    %62 = vector.shape_cast %61 : vector<16xf32> to vector<16x1xf32>
    %63 = vector.broadcast %62 : vector<16x1xf32> to vector<16x16xf32>
    %64 = arith.divf %60, %63 : vector<16x16xf32>
    %65 = arith.truncf %64 : vector<16x16xf32> to vector<16x16xbf16>
    %cst_21 = arith.constant dense<0.000000e+00> : vector<16x32xf32>
    %66 = tpu.matmul %65, %54, %cst_21 {dimension_numbers = #tpu.dot_dimension_numbers<[1], [0], [0], [1], [0, 0, 1, 1], [], []>} : vector<16x16xbf16>, vector<16x32xbf16>, vector<16x32xf32> -> vector<16x32xf32>
    %67 = arith.truncf %66 : vector<16x32xf32> to vector<16x32xbf16>
    %68 = vector.extract_strided_slice %27 {offsets = [32, 0], sizes = [32, 128], strides = [1, 1]} : vector<128x128xbf16> to vector<32x128xbf16>
    %cst_22 = arith.constant dense<0.000000e+00> : vector<16x128xf32>
    %69 = tpu.matmul %67, %68, %cst_22 {dimension_numbers = #tpu.dot_dimension_numbers<[1], [0], [0], [1], [0, 0, 1, 1], [], []>} : vector<16x32xbf16>, vector<32x128xbf16>, vector<16x128xf32> -> vector<16x128xf32>
    %70 = arith.addf %51, %69 : vector<16x128xf32>
    %71 = vector.extract_strided_slice %30 {offsets = [0, 64], sizes = [16, 32], strides = [1, 1]} : vector<16x128xbf16> to vector<16x32xbf16>
    %72 = vector.extract_strided_slice %31 {offsets = [0, 64], sizes = [16, 32], strides = [1, 1]} : vector<16x128xbf16> to vector<16x32xbf16>
    %73 = vector.extract_strided_slice %32 {offsets = [0, 64], sizes = [16, 32], strides = [1, 1]} : vector<16x128xbf16> to vector<16x32xbf16>
    %cst_23 = arith.constant dense<0.000000e+00> : vector<16x16xf32>
    %74 = tpu.matmul %71, %72, %cst_23 {dimension_numbers = #tpu.dot_dimension_numbers<[1], [1], [0], [0], [0, 0, 1, 0], [], []>} : vector<16x32xbf16>, vector<16x32xbf16>, vector<16x16xf32> -> vector<16x16xf32>
    %cst_24 = arith.constant dense<0xFF800000> : vector<16xf32>
    %75 = vector.multi_reduction <maximumf>, %74, %cst_24 [1] : vector<16x16xf32> to vector<16xf32>
    %76 = vector.shape_cast %75 : vector<16xf32> to vector<16x1xf32>
    %77 = vector.broadcast %76 : vector<16x1xf32> to vector<16x16xf32>
    %78 = arith.subf %74, %77 : vector<16x16xf32>
    %79 = math.exp %78 : vector<16x16xf32>
    %cst_25 = arith.constant dense<0.000000e+00> : vector<16xf32>
    %80 = vector.multi_reduction <add>, %79, %cst_25 [1] : vector<16x16xf32> to vector<16xf32>
    %81 = vector.shape_cast %80 : vector<16xf32> to vector<16x1xf32>
    %82 = vector.broadcast %81 : vector<16x1xf32> to vector<16x16xf32>
    %83 = arith.divf %79, %82 : vector<16x16xf32>
    %84 = arith.truncf %83 : vector<16x16xf32> to vector<16x16xbf16>
    %cst_26 = arith.constant dense<0.000000e+00> : vector<16x32xf32>
    %85 = tpu.matmul %84, %73, %cst_26 {dimension_numbers = #tpu.dot_dimension_numbers<[1], [0], [0], [1], [0, 0, 1, 1], [], []>} : vector<16x16xbf16>, vector<16x32xbf16>, vector<16x32xf32> -> vector<16x32xf32>
    %86 = arith.truncf %85 : vector<16x32xf32> to vector<16x32xbf16>
    %87 = vector.extract_strided_slice %27 {offsets = [64, 0], sizes = [32, 128], strides = [1, 1]} : vector<128x128xbf16> to vector<32x128xbf16>
    %cst_27 = arith.constant dense<0.000000e+00> : vector<16x128xf32>
    %88 = tpu.matmul %86, %87, %cst_27 {dimension_numbers = #tpu.dot_dimension_numbers<[1], [0], [0], [1], [0, 0, 1, 1], [], []>} : vector<16x32xbf16>, vector<32x128xbf16>, vector<16x128xf32> -> vector<16x128xf32>
    %89 = arith.addf %70, %88 : vector<16x128xf32>
    %90 = vector.extract_strided_slice %30 {offsets = [0, 96], sizes = [16, 32], strides = [1, 1]} : vector<16x128xbf16> to vector<16x32xbf16>
    %91 = vector.extract_strided_slice %31 {offsets = [0, 96], sizes = [16, 32], strides = [1, 1]} : vector<16x128xbf16> to vector<16x32xbf16>
    %92 = vector.extract_strided_slice %32 {offsets = [0, 96], sizes = [16, 32], strides = [1, 1]} : vector<16x128xbf16> to vector<16x32xbf16>
    %cst_28 = arith.constant dense<0.000000e+00> : vector<16x16xf32>
    %93 = tpu.matmul %90, %91, %cst_28 {dimension_numbers = #tpu.dot_dimension_numbers<[1], [1], [0], [0], [0, 0, 1, 0], [], []>} : vector<16x32xbf16>, vector<16x32xbf16>, vector<16x16xf32> -> vector<16x16xf32>
    %cst_29 = arith.constant dense<0xFF800000> : vector<16xf32>
    %94 = vector.multi_reduction <maximumf>, %93, %cst_29 [1] : vector<16x16xf32> to vector<16xf32>
    %95 = vector.shape_cast %94 : vector<16xf32> to vector<16x1xf32>
    %96 = vector.broadcast %95 : vector<16x1xf32> to vector<16x16xf32>
    %97 = arith.subf %93, %96 : vector<16x16xf32>
    %98 = math.exp %97 : vector<16x16xf32>
    %cst_30 = arith.constant dense<0.000000e+00> : vector<16xf32>
    %99 = vector.multi_reduction <add>, %98, %cst_30 [1] : vector<16x16xf32> to vector<16xf32>
    %100 = vector.shape_cast %99 : vector<16xf32> to vector<16x1xf32>
    %101 = vector.broadcast %100 : vector<16x1xf32> to vector<16x16xf32>
    %102 = arith.divf %98, %101 : vector<16x16xf32>
    %103 = arith.truncf %102 : vector<16x16xf32> to vector<16x16xbf16>
    %cst_31 = arith.constant dense<0.000000e+00> : vector<16x32xf32>
    %104 = tpu.matmul %103, %92, %cst_31 {dimension_numbers = #tpu.dot_dimension_numbers<[1], [0], [0], [1], [0, 0, 1, 1], [], []>} : vector<16x16xbf16>, vector<16x32xbf16>, vector<16x32xf32> -> vector<16x32xf32>
    %105 = arith.truncf %104 : vector<16x32xf32> to vector<16x32xbf16>
    %106 = vector.extract_strided_slice %27 {offsets = [96, 0], sizes = [32, 128], strides = [1, 1]} : vector<128x128xbf16> to vector<32x128xbf16>
    %cst_32 = arith.constant dense<0.000000e+00> : vector<16x128xf32>
    %107 = tpu.matmul %105, %106, %cst_32 {dimension_numbers = #tpu.dot_dimension_numbers<[1], [0], [0], [1], [0, 0, 1, 1], [], []>} : vector<16x32xbf16>, vector<32x128xbf16>, vector<16x128xf32> -> vector<16x128xf32>
    %108 = arith.addf %89, %107 : vector<16x128xf32>
    %109 = vector.extract_strided_slice %17 {offsets = [16, 0], sizes = [16, 128], strides = [1, 1]} : vector<32x128xbf16> to vector<16x128xbf16>
    %110 = vector.extract_strided_slice %21 {offsets = [16, 0], sizes = [16, 128], strides = [1, 1]} : vector<32x128xbf16> to vector<16x128xbf16>
    %111 = vector.extract_strided_slice %26 {offsets = [16, 0], sizes = [16, 128], strides = [1, 1]} : vector<32x128xbf16> to vector<16x128xbf16>
    %112 = vector.extract_strided_slice %109 {offsets = [0, 0], sizes = [16, 32], strides = [1, 1]} : vector<16x128xbf16> to vector<16x32xbf16>
    %113 = vector.extract_strided_slice %110 {offsets = [0, 0], sizes = [16, 32], strides = [1, 1]} : vector<16x128xbf16> to vector<16x32xbf16>
    %114 = vector.extract_strided_slice %111 {offsets = [0, 0], sizes = [16, 32], strides = [1, 1]} : vector<16x128xbf16> to vector<16x32xbf16>
    %cst_33 = arith.constant dense<0.000000e+00> : vector<16x16xf32>
    %115 = tpu.matmul %112, %113, %cst_33 {dimension_numbers = #tpu.dot_dimension_numbers<[1], [1], [0], [0], [0, 0, 1, 0], [], []>} : vector<16x32xbf16>, vector<16x32xbf16>, vector<16x16xf32> -> vector<16x16xf32>
    %cst_34 = arith.constant dense<0xFF800000> : vector<16xf32>
    %116 = vector.multi_reduction <maximumf>, %115, %cst_34 [1] : vector<16x16xf32> to vector<16xf32>
    %117 = vector.shape_cast %116 : vector<16xf32> to vector<16x1xf32>
    %118 = vector.broadcast %117 : vector<16x1xf32> to vector<16x16xf32>
    %119 = arith.subf %115, %118 : vector<16x16xf32>
    %120 = math.exp %119 : vector<16x16xf32>
    %cst_35 = arith.constant dense<0.000000e+00> : vector<16xf32>
    %121 = vector.multi_reduction <add>, %120, %cst_35 [1] : vector<16x16xf32> to vector<16xf32>
    %122 = vector.shape_cast %121 : vector<16xf32> to vector<16x1xf32>
    %123 = vector.broadcast %122 : vector<16x1xf32> to vector<16x16xf32>
    %124 = arith.divf %120, %123 : vector<16x16xf32>
    %125 = arith.truncf %124 : vector<16x16xf32> to vector<16x16xbf16>
    %cst_36 = arith.constant dense<0.000000e+00> : vector<16x32xf32>
    %126 = tpu.matmul %125, %114, %cst_36 {dimension_numbers = #tpu.dot_dimension_numbers<[1], [0], [0], [1], [0, 0, 1, 1], [], []>} : vector<16x16xbf16>, vector<16x32xbf16>, vector<16x32xf32> -> vector<16x32xf32>
    %127 = arith.truncf %126 : vector<16x32xf32> to vector<16x32xbf16>
    %128 = vector.extract_strided_slice %27 {offsets = [0, 0], sizes = [32, 128], strides = [1, 1]} : vector<128x128xbf16> to vector<32x128xbf16>
    %cst_37 = arith.constant dense<0.000000e+00> : vector<16x128xf32>
    %129 = tpu.matmul %127, %128, %cst_37 {dimension_numbers = #tpu.dot_dimension_numbers<[1], [0], [0], [1], [0, 0, 1, 1], [], []>} : vector<16x32xbf16>, vector<32x128xbf16>, vector<16x128xf32> -> vector<16x128xf32>
    %130 = arith.addf %29, %129 : vector<16x128xf32>
    %131 = vector.extract_strided_slice %109 {offsets = [0, 32], sizes = [16, 32], strides = [1, 1]} : vector<16x128xbf16> to vector<16x32xbf16>
    %132 = vector.extract_strided_slice %110 {offsets = [0, 32], sizes = [16, 32], strides = [1, 1]} : vector<16x128xbf16> to vector<16x32xbf16>
    %133 = vector.extract_strided_slice %111 {offsets = [0, 32], sizes = [16, 32], strides = [1, 1]} : vector<16x128xbf16> to vector<16x32xbf16>
    %cst_38 = arith.constant dense<0.000000e+00> : vector<16x16xf32>
    %134 = tpu.matmul %131, %132, %cst_38 {dimension_numbers = #tpu.dot_dimension_numbers<[1], [1], [0], [0], [0, 0, 1, 0], [], []>} : vector<16x32xbf16>, vector<16x32xbf16>, vector<16x16xf32> -> vector<16x16xf32>
    %cst_39 = arith.constant dense<0xFF800000> : vector<16xf32>
    %135 = vector.multi_reduction <maximumf>, %134, %cst_39 [1] : vector<16x16xf32> to vector<16xf32>
    %136 = vector.shape_cast %135 : vector<16xf32> to vector<16x1xf32>
    %137 = vector.broadcast %136 : vector<16x1xf32> to vector<16x16xf32>
    %138 = arith.subf %134, %137 : vector<16x16xf32>
    %139 = math.exp %138 : vector<16x16xf32>
    %cst_40 = arith.constant dense<0.000000e+00> : vector<16xf32>
    %140 = vector.multi_reduction <add>, %139, %cst_40 [1] : vector<16x16xf32> to vector<16xf32>
    %141 = vector.shape_cast %140 : vector<16xf32> to vector<16x1xf32>
    %142 = vector.broadcast %141 : vector<16x1xf32> to vector<16x16xf32>
    %143 = arith.divf %139, %142 : vector<16x16xf32>
    %144 = arith.truncf %143 : vector<16x16xf32> to vector<16x16xbf16>
    %cst_41 = arith.constant dense<0.000000e+00> : vector<16x32xf32>
    %145 = tpu.matmul %144, %133, %cst_41 {dimension_numbers = #tpu.dot_dimension_numbers<[1], [0], [0], [1], [0, 0, 1, 1], [], []>} : vector<16x16xbf16>, vector<16x32xbf16>, vector<16x32xf32> -> vector<16x32xf32>
    %146 = arith.truncf %145 : vector<16x32xf32> to vector<16x32xbf16>
    %147 = vector.extract_strided_slice %27 {offsets = [32, 0], sizes = [32, 128], strides = [1, 1]} : vector<128x128xbf16> to vector<32x128xbf16>
    %cst_42 = arith.constant dense<0.000000e+00> : vector<16x128xf32>
    %148 = tpu.matmul %146, %147, %cst_42 {dimension_numbers = #tpu.dot_dimension_numbers<[1], [0], [0], [1], [0, 0, 1, 1], [], []>} : vector<16x32xbf16>, vector<32x128xbf16>, vector<16x128xf32> -> vector<16x128xf32>
    %149 = arith.addf %130, %148 : vector<16x128xf32>
    %150 = vector.extract_strided_slice %109 {offsets = [0, 64], sizes = [16, 32], strides = [1, 1]} : vector<16x128xbf16> to vector<16x32xbf16>
    %151 = vector.extract_strided_slice %110 {offsets = [0, 64], sizes = [16, 32], strides = [1, 1]} : vector<16x128xbf16> to vector<16x32xbf16>
    %152 = vector.extract_strided_slice %111 {offsets = [0, 64], sizes = [16, 32], strides = [1, 1]} : vector<16x128xbf16> to vector<16x32xbf16>
    %cst_43 = arith.constant dense<0.000000e+00> : vector<16x16xf32>
    %153 = tpu.matmul %150, %151, %cst_43 {dimension_numbers = #tpu.dot_dimension_numbers<[1], [1], [0], [0], [0, 0, 1, 0], [], []>} : vector<16x32xbf16>, vector<16x32xbf16>, vector<16x16xf32> -> vector<16x16xf32>
    %cst_44 = arith.constant dense<0xFF800000> : vector<16xf32>
    %154 = vector.multi_reduction <maximumf>, %153, %cst_44 [1] : vector<16x16xf32> to vector<16xf32>
    %155 = vector.shape_cast %154 : vector<16xf32> to vector<16x1xf32>
    %156 = vector.broadcast %155 : vector<16x1xf32> to vector<16x16xf32>
    %157 = arith.subf %153, %156 : vector<16x16xf32>
    %158 = math.exp %157 : vector<16x16xf32>
    %cst_45 = arith.constant dense<0.000000e+00> : vector<16xf32>
    %159 = vector.multi_reduction <add>, %158, %cst_45 [1] : vector<16x16xf32> to vector<16xf32>
    %160 = vector.shape_cast %159 : vector<16xf32> to vector<16x1xf32>
    %161 = vector.broadcast %160 : vector<16x1xf32> to vector<16x16xf32>
    %162 = arith.divf %158, %161 : vector<16x16xf32>
    %163 = arith.truncf %162 : vector<16x16xf32> to vector<16x16xbf16>
    %cst_46 = arith.constant dense<0.000000e+00> : vector<16x32xf32>
    %164 = tpu.matmul %163, %152, %cst_46 {dimension_numbers = #tpu.dot_dimension_numbers<[1], [0], [0], [1], [0, 0, 1, 1], [], []>} : vector<16x16xbf16>, vector<16x32xbf16>, vector<16x32xf32> -> vector<16x32xf32>
    %165 = arith.truncf %164 : vector<16x32xf32> to vector<16x32xbf16>
    %166 = vector.extract_strided_slice %27 {offsets = [64, 0], sizes = [32, 128], strides = [1, 1]} : vector<128x128xbf16> to vector<32x128xbf16>
    %cst_47 = arith.constant dense<0.000000e+00> : vector<16x128xf32>
    %167 = tpu.matmul %165, %166, %cst_47 {dimension_numbers = #tpu.dot_dimension_numbers<[1], [0], [0], [1], [0, 0, 1, 1], [], []>} : vector<16x32xbf16>, vector<32x128xbf16>, vector<16x128xf32> -> vector<16x128xf32>
    %168 = arith.addf %149, %167 : vector<16x128xf32>
    %169 = vector.extract_strided_slice %109 {offsets = [0, 96], sizes = [16, 32], strides = [1, 1]} : vector<16x128xbf16> to vector<16x32xbf16>
    %170 = vector.extract_strided_slice %110 {offsets = [0, 96], sizes = [16, 32], strides = [1, 1]} : vector<16x128xbf16> to vector<16x32xbf16>
    %171 = vector.extract_strided_slice %111 {offsets = [0, 96], sizes = [16, 32], strides = [1, 1]} : vector<16x128xbf16> to vector<16x32xbf16>
    %cst_48 = arith.constant dense<0.000000e+00> : vector<16x16xf32>
    %172 = tpu.matmul %169, %170, %cst_48 {dimension_numbers = #tpu.dot_dimension_numbers<[1], [1], [0], [0], [0, 0, 1, 0], [], []>} : vector<16x32xbf16>, vector<16x32xbf16>, vector<16x16xf32> -> vector<16x16xf32>
    %cst_49 = arith.constant dense<0xFF800000> : vector<16xf32>
    %173 = vector.multi_reduction <maximumf>, %172, %cst_49 [1] : vector<16x16xf32> to vector<16xf32>
    %174 = vector.shape_cast %173 : vector<16xf32> to vector<16x1xf32>
    %175 = vector.broadcast %174 : vector<16x1xf32> to vector<16x16xf32>
    %176 = arith.subf %172, %175 : vector<16x16xf32>
    %177 = math.exp %176 : vector<16x16xf32>
    %cst_50 = arith.constant dense<0.000000e+00> : vector<16xf32>
    %178 = vector.multi_reduction <add>, %177, %cst_50 [1] : vector<16x16xf32> to vector<16xf32>
    %179 = vector.shape_cast %178 : vector<16xf32> to vector<16x1xf32>
    %180 = vector.broadcast %179 : vector<16x1xf32> to vector<16x16xf32>
    %181 = arith.divf %177, %180 : vector<16x16xf32>
    %182 = arith.truncf %181 : vector<16x16xf32> to vector<16x16xbf16>
    %cst_51 = arith.constant dense<0.000000e+00> : vector<16x32xf32>
    %183 = tpu.matmul %182, %171, %cst_51 {dimension_numbers = #tpu.dot_dimension_numbers<[1], [0], [0], [1], [0, 0, 1, 1], [], []>} : vector<16x16xbf16>, vector<16x32xbf16>, vector<16x32xf32> -> vector<16x32xf32>
    %184 = arith.truncf %183 : vector<16x32xf32> to vector<16x32xbf16>
    %185 = vector.extract_strided_slice %27 {offsets = [96, 0], sizes = [32, 128], strides = [1, 1]} : vector<128x128xbf16> to vector<32x128xbf16>
    %cst_52 = arith.constant dense<0.000000e+00> : vector<16x128xf32>
    %186 = tpu.matmul %184, %185, %cst_52 {dimension_numbers = #tpu.dot_dimension_numbers<[1], [0], [0], [1], [0, 0, 1, 1], [], []>} : vector<16x32xbf16>, vector<32x128xbf16>, vector<16x128xf32> -> vector<16x128xf32>
    %187 = arith.addf %168, %186 : vector<16x128xf32>
    %188 = tpu.concatenate %108, %187 in 0 : vector<16x128xf32>, vector<16x128xf32> -> vector<32x128xf32>
    %189 = arith.addf %0, %188 : vector<32x128xf32>
    %cst_53 = arith.constant dense<0.000000e+00> : vector<32xf32>
    %190 = vector.multi_reduction <add>, %189, %cst_53 [1] : vector<32x128xf32> to vector<32xf32>
    %191 = vector.shape_cast %190 : vector<32xf32> to vector<32x1xf32>
    %cst_54 = arith.constant 1.280000e+02 : f32
    %192 = vector.broadcast %cst_54 : f32 to vector<32x1xf32>
    %193 = arith.divf %191, %192 : vector<32x1xf32>
    %194 = vector.broadcast %193 : vector<32x1xf32> to vector<32x128xf32>
    %195 = arith.subf %189, %194 : vector<32x128xf32>
    %196 = arith.mulf %195, %195 : vector<32x128xf32>
    %cst_55 = arith.constant dense<0.000000e+00> : vector<32xf32>
    %197 = vector.multi_reduction <add>, %196, %cst_55 [1] : vector<32x128xf32> to vector<32xf32>
    %198 = vector.shape_cast %197 : vector<32xf32> to vector<32x1xf32>
    %cst_56 = arith.constant 1.280000e+02 : f32
    %199 = vector.broadcast %cst_56 : f32 to vector<32x1xf32>
    %200 = arith.divf %198, %199 : vector<32x1xf32>
    %cst_57 = arith.constant 9.99999974E-6 : f32
    %201 = vector.broadcast %cst_57 : f32 to vector<32x1xf32>
    %202 = arith.addf %200, %201 : vector<32x1xf32>
    %203 = math.rsqrt %202 : vector<32x1xf32>
    %204 = vector.broadcast %203 : vector<32x1xf32> to vector<32x128xf32>
    %205 = arith.mulf %195, %204 : vector<32x128xf32>
    %206 = vector.broadcast %8 : vector<1x128xf32> to vector<32x128xf32>
    %207 = arith.mulf %205, %206 : vector<32x128xf32>
    %208 = vector.broadcast %9 : vector<1x128xf32> to vector<32x128xf32>
    %209 = arith.addf %207, %208 : vector<32x128xf32>
    %c0_58 = arith.constant 0 : index
    %c0_59 = arith.constant 0 : index
    %210 = vector.load %arg5[%c0_58, %c0_59] : memref<32x128xf32, #tpu.memory_space<vmem>>, vector<32x128xf32>
    tpu.vector_store %arg5[%c0_58, %c0_59], %209 {strides = array<i32>} : memref<32x128xf32, #tpu.memory_space<vmem>>, vector<32x128xf32>,
    return
  }
  func.func @transform_0(%arg0: i32) -> (i32, i32) {
    %c0_i32 = arith.constant 0 : i32
    %c0_i32_0 = arith.constant 0 : i32
    %c0_i32_1 = arith.constant 0 : i32
    return %c0_i32, %c0_i32_0 : i32, i32
  }
  func.func @transform_1(%arg0: i32) -> (i32, i32) {
    %c0_i32 = arith.constant 0 : i32
    %c0_i32_0 = arith.constant 0 : i32
    %c0_i32_1 = arith.constant 0 : i32
    return %c0_i32, %c0_i32_0 : i32, i32
  }
  func.func @transform_2(%arg0: i32) -> (i32, i32) {
    %c0_i32 = arith.constant 0 : i32
    %c0_i32_0 = arith.constant 0 : i32
    %c0_i32_1 = arith.constant 0 : i32
    return %c0_i32, %c0_i32_0 : i32, i32
  }
  func.func @transform_3(%arg0: i32) -> (i32, i32) {
    %c0_i32 = arith.constant 0 : i32
    %c0_i32_0 = arith.constant 0 : i32
    %c0_i32_1 = arith.constant 0 : i32
    return %c0_i32, %c0_i32_0 : i32, i32
  }
  func.func @transform_4(%arg0: i32) -> (i32, i32) {
    %c0_i32 = arith.constant 0 : i32
    %c0_i32_0 = arith.constant 0 : i32
    %c0_i32_1 = arith.constant 0 : i32
    return %c0_i32, %c0_i32_0 : i32, i32
  }
}

</mosaic_0001>

<llo_original>
// kernel: self_attention_layer.1
$region0: #{self_attention_layer.1}
  #allocation0 [shape = 'u32[]', space=smem, size = 0x4, offset = 0x4, fixed_abs, tag = 'smem constant byte address 0x4 - core index']
  #allocation1 [shape = 'u32[144,128]{1,0:T(1,128)}', space=vmem, size = 0x12000, scoped, tag = 'internal scratch']
  %s0 = inlined_call_operand.hbm [shape: f32[32,128], index: 0, kind: input, shape index: {}]
  %s1 = inlined_call_operand.hbm [shape: f32[32,128], index: 1, kind: input, shape index: {}]
  %s2 = inlined_call_operand.hbm [shape: bf16[128,512], index: 2, kind: input, shape index: {}]
  %s3 = inlined_call_operand.vmem [shape: f32[8,128], index: 3, kind: input, shape index: {}]
  %s4 = inlined_call_operand.hbm [shape: f32[32,128], index: 4, kind: output, shape index: {}]
  %s5 = sld [smem:[#allocation0]]
  $region38: #{self_attention_layer.1} parent=0
    _
  %s7 = ssub.s32 1, %s5
  %s8 = scalar_select 0, %s7, %s5
  $region1: #{self_attention_layer.1} parent=0
    #allocation2 [shape = 'u8[16384]{0}', space=vmem, size = 0x4000, scoped, tag = 'input window, operand 0, single buffered']
    #allocation3 [shape = 's32[1]{0}', space=sflag, size = 0x4, scoped, tag = 'scoped memory for self_attention_layer.1']
    #allocation4 [shape = 's32[1]{0}', space=sflag, size = 0x4, scoped, tag = 'scoped memory for self_attention_layer.1']
    #allocation5 [shape = 'u8[16384]{0}', space=vmem, size = 0x4000, scoped, tag = 'input window, operand 1, single buffered']
    #allocation6 [shape = 's32[1]{0}', space=sflag, size = 0x4, scoped, tag = 'scoped memory for self_attention_layer.1']
    #allocation7 [shape = 'u8[131072]{0}', space=vmem, size = 0x20000, scoped, tag = 'input window, operand 2, single buffered']
    #allocation8 [shape = 'u8[16384]{0}', space=vmem, size = 0x4000, scoped, tag = 'output window, operand 0, single buffered']
    %9 = vsyncpa [#allocation3], 0
    %10 = vsyncpa [#allocation6], 0
    %11 = vsyncpa [#allocation4], 0
    // Predicated region
    $region2: #{self_attention_layer.1} parent=1 // pred_check
      _
    $region3: #{self_attention_layer.1} parent=1 // pred_check_branch
      %13 = sbr.rel (0) target = $region5
    $region4: #{self_attention_layer.1} parent=1 // pred_region
      %s15 = ssub.s32 512, 512
      %16 = vsyncadd [#allocation3], %s15
      %s17 = sshll.u32 [#allocation2], 4
      %s18 = int_to_ptr.vmem [resolvable:$true] %s17
      %23 = dma.hbm_to_vmem [thread:$0]  %s0, 512, %s18, [#allocation3], 128, 128, 8
    $region5: #{self_attention_layer.1} parent=1 // pred_fallthru
      _
    // Predicated region
    $region6: #{self_attention_layer.1} parent=1 // pred_check
      _
    $region7: #{self_attention_layer.1} parent=1 // pred_check_branch
      %25 = sbr.rel (0) target = $region9
    $region8: #{self_attention_layer.1} parent=1 // pred_region
      %s27 = ssub.s32 512, 512
      %28 = vsyncadd [#allocation6], %s27
      %s29 = sshll.u32 [#allocation5], 4
      %s30 = int_to_ptr.vmem [resolvable:$true] %s29
      %35 = dma.hbm_to_vmem [thread:$0]  %s1, 512, %s30, [#allocation6], 128, 128, 8
    $region9: #{self_attention_layer.1} parent=1 // pred_fallthru
      _
    // Predicated region
    $region10: #{self_attention_layer.1} parent=1 // pred_check
      _
    $region11: #{self_attention_layer.1} parent=1 // pred_check_branch
      %37 = sbr.rel (0) target = $region13
    $region12: #{self_attention_layer.1} parent=1 // pred_region
      %s39 = ssub.s32 4096, 4096
      %40 = vsyncadd [#allocation6], %s39
      %s41 = sshll.u32 [#allocation7], 4
      %s42 = int_to_ptr.vmem [resolvable:$true] %s41
      %47 = dma.hbm_to_vmem [thread:$0]  %s2, 4096, %s42, [#allocation6], 256, 256, 16
    $region13: #{self_attention_layer.1} parent=1 // pred_fallthru
      _
    // Predicated region
    $region14: #{self_attention_layer.1} parent=1 // pred_check
      _
    $region15: #{self_attention_layer.1} parent=1 // pred_check_branch
      %49 = sbr.rel (0) target = $region17
    $region16: #{self_attention_layer.1} parent=1 // pred_region
      _
    $region17: #{self_attention_layer.1} parent=1 // pred_fallthru
      _
    // Predicated region
    $region18: #{self_attention_layer.1} parent=1 // pred_check
      _
    $region19: #{self_attention_layer.1} parent=1 // pred_check_branch
      %51 = sbr.rel (0) target = $region21
    $region20: #{self_attention_layer.1} parent=1 // pred_region
      %52 = dma.done [#allocation3], 512
    $region21: #{self_attention_layer.1} parent=1 // pred_fallthru
      _
    // Predicated region
    $region22: #{self_attention_layer.1} parent=1 // pred_check
      _
    $region23: #{self_attention_layer.1} parent=1 // pred_check_branch
      %54 = sbr.rel (0) target = $region25
    $region24: #{self_attention_layer.1} parent=1 // pred_region
      %55 = dma.done [#allocation6], 512
    $region25: #{self_attention_layer.1} parent=1 // pred_fallthru
      _
    // Predicated region
    $region26: #{self_attention_layer.1} parent=1 // pred_check
      _
    $region27: #{self_attention_layer.1} parent=1 // pred_check_branch
      %57 = sbr.rel (0) target = $region29
    $region28: #{self_attention_layer.1} parent=1 // pred_region
      %58 = dma.done [#allocation6], 4096
    $region29: #{self_attention_layer.1} parent=1 // pred_fallthru
      _
    %v60 = vld [vmem:[#allocation2] sm:$0xff]
    %v61 = vld [vmem:[#allocation2 + $0x8] sm:$0xff]
    %v62 = vld [vmem:[#allocation2 + $0x10] sm:$0xff]
    %v63 = vld [vmem:[#allocation2 + $0x18] sm:$0xff]
    %v64 = vld [vmem:[#allocation5] sm:$0xff]
    %v65 = vld [vmem:[#allocation5 + $0x8] sm:$0xff]
    %v66 = vld [vmem:[#allocation5 + $0x10] sm:$0xff]
    %v67 = vld [vmem:[#allocation5 + $0x18] sm:$0xff]
    %v68 = vadd.f32 %v60, %v64
    %v69 = vadd.f32 %v61, %v65
    %v70 = vadd.f32 %v62, %v66
    %v71 = vadd.f32 %v63, %v67
    %v72 = vld [vmem:[#allocation7] sm:$0xff]
    %v73 = vld [vmem:[#allocation7 + $0x8] sm:$0xff]
    %v74 = vld [vmem:[#allocation7 + $0x10] sm:$0xff]
    %v75 = vld [vmem:[#allocation7 + $0x18] sm:$0xff]
    %v76 = vld [vmem:[#allocation7 + $0x20] sm:$0xff]
    %v77 = vld [vmem:[#allocation7 + $0x28] sm:$0xff]
    %v78 = vld [vmem:[#allocation7 + $0x30] sm:$0xff]
    %v79 = vld [vmem:[#allocation7 + $0x38] sm:$0xff]
    %v80 = vld [vmem:[#allocation7 + $0x40] sm:$0xff]
    %v81 = vld [vmem:[#allocation7 + $0x48] sm:$0xff]
    %v82 = vld [vmem:[#allocation7 + $0x50] sm:$0xff]
    %v83 = vld [vmem:[#allocation7 + $0x58] sm:$0xff]
    %v84 = vld [vmem:[#allocation7 + $0x60] sm:$0xff]
    %v85 = vld [vmem:[#allocation7 + $0x68] sm:$0xff]
    %v86 = vld [vmem:[#allocation7 + $0x70] sm:$0xff]
    %v87 = vld [vmem:[#allocation7 + $0x78] sm:$0xff]
    %v88 = vld [vmem:[#allocation7 + $0x80] sm:$0xff]
    %v89 = vld [vmem:[#allocation7 + $0x88] sm:$0xff]
    %v90 = vld [vmem:[#allocation7 + $0x90] sm:$0xff]
    %v91 = vld [vmem:[#allocation7 + $0x98] sm:$0xff]
    %v92 = vld [vmem:[#allocation7 + $0xa0] sm:$0xff]
    %v93 = vld [vmem:[#allocation7 + $0xa8] sm:$0xff]
    %v94 = vld [vmem:[#allocation7 + $0xb0] sm:$0xff]
    %v95 = vld [vmem:[#allocation7 + $0xb8] sm:$0xff]
    %v96 = vld [vmem:[#allocation7 + $0xc0] sm:$0xff]
    %v97 = vld [vmem:[#allocation7 + $0xc8] sm:$0xff]
    %v98 = vld [vmem:[#allocation7 + $0xd0] sm:$0xff]
    %v99 = vld [vmem:[#allocation7 + $0xd8] sm:$0xff]
    %v100 = vld [vmem:[#allocation7 + $0xe0] sm:$0xff]
    %v101 = vld [vmem:[#allocation7 + $0xe8] sm:$0xff]
    %v102 = vld [vmem:[#allocation7 + $0xf0] sm:$0xff]
    %v103 = vld [vmem:[#allocation7 + $0xf8] sm:$0xff]
    %v104 = vld [vmem:[%s3] sm:$0x1]
    %v105 = vld [vmem:[%s3 + $0x1] sm:$0x1]
    %v106 = vld [vmem:[%s3 + $0x2] sm:$0x1]
    %v107 = vld [vmem:[%s3 + $0x3] sm:$0x1]
    %v108 = vld [vmem:[%s3 + $0x4] sm:$0x1]
    %v109 = vld [vmem:[%s3 + $0x5] sm:$0x1]
    %v110 = vpack.c.bf16 %v69, %v68
    %v111 = vpack.c.bf16 %v71, %v70
    %v112 = vpack.c.bf16 %v61, %v60
    %v113 = vpack.c.bf16 %v63, %v62
    %v130 = vunpack.c.l.b16 %v72
    %v131 = vunpack.c.h.b16 %v72
    %v132 = vunpack.c.l.b16 %v74
    %v133 = vunpack.c.h.b16 %v74
    %v134 = vunpack.c.l.b16 %v76
    %v135 = vunpack.c.h.b16 %v76
    %v136 = vunpack.c.l.b16 %v78
    %v137 = vunpack.c.h.b16 %v78
    %v138 = vunpack.c.l.b16 %v80
    %v139 = vunpack.c.h.b16 %v80
    %v140 = vunpack.c.l.b16 %v82
    %v141 = vunpack.c.h.b16 %v82
    %v142 = vunpack.c.l.b16 %v84
    %v143 = vunpack.c.h.b16 %v84
    %v144 = vunpack.c.l.b16 %v86
    %v145 = vunpack.c.h.b16 %v86
    %v146 = vunpack.c.l.b16 %v88
    %v147 = vunpack.c.h.b16 %v88
    %v148 = vunpack.c.l.b16 %v90
    %v149 = vunpack.c.h.b16 %v90
    %v150 = vunpack.c.l.b16 %v92
    %v151 = vunpack.c.h.b16 %v92
    %v152 = vunpack.c.l.b16 %v94
    %v153 = vunpack.c.h.b16 %v94
    %v154 = vunpack.c.l.b16 %v96
    %v155 = vunpack.c.h.b16 %v96
    %v156 = vunpack.c.l.b16 %v98
    %v157 = vunpack.c.h.b16 %v98
    %v158 = vunpack.c.l.b16 %v100
    %v159 = vunpack.c.h.b16 %v100
    %v160 = vunpack.c.l.b16 %v102
    %v161 = vunpack.c.h.b16 %v102
    %v162 = vpack.c.b16 %v132, %v130
    %v163 = vpack.c.b16 %v133, %v131
    %v164 = vpack.c.b16 %v136, %v134
    %v165 = vpack.c.b16 %v137, %v135
    %v166 = vpack.c.b16 %v140, %v138
    %v167 = vpack.c.b16 %v141, %v139
    %v168 = vpack.c.b16 %v144, %v142
    %v169 = vpack.c.b16 %v145, %v143
    %v170 = vpack.c.b16 %v148, %v146
    %v171 = vpack.c.b16 %v149, %v147
    %v172 = vpack.c.b16 %v152, %v150
    %v173 = vpack.c.b16 %v153, %v151
    %v174 = vpack.c.b16 %v156, %v154
    %v175 = vpack.c.b16 %v157, %v155
    %v176 = vpack.c.b16 %v160, %v158
    %v177 = vpack.c.b16 %v161, %v159
    %194 = vmatprep.subr.bf16.mxu0 %v163
    %195 = vmatpush1.bf16.msra.mxu0 %v162
    %196 = vmatprep.subr.bf16.mxu0 %v165
    %197 = vmatpush1.bf16.msra.mxu0 %v164
    %198 = vmatprep.subr.bf16.mxu0 %v167
    %199 = vmatpush1.bf16.msra.mxu0 %v166
    %200 = vmatprep.subr.bf16.mxu0 %v169
    %201 = vmatpush1.bf16.msra.mxu0 %v168
    %202 = vmatprep.subr.bf16.mxu0 %v171
    %203 = vmatpush1.bf16.msra.mxu0 %v170
    %204 = vmatprep.subr.bf16.mxu0 %v173
    %205 = vmatpush1.bf16.msra.mxu0 %v172
    %206 = vmatprep.subr.bf16.mxu0 %v175
    %207 = vmatpush1.bf16.msra.mxu0 %v174
    %208 = vmatprep.subr.bf16.mxu0 %v177
    %209 = vmatpush1.bf16.msra.mxu0 %v176
    %210 = vmatprep.subr.bf16.mxu0 0
    %211 = vmatpush1.bf16.msra.mxu0 0
    %212 = vmatprep.subr.bf16.mxu0 0
    %213 = vmatpush1.bf16.msra.mxu0 0
    %214 = vmatprep.subr.bf16.mxu0 0
    %215 = vmatpush1.bf16.msra.mxu0 0
    %216 = vmatprep.subr.bf16.mxu0 0
    %217 = vmatpush1.bf16.msra.mxu0 0
    %218 = vmatprep.subr.bf16.mxu0 0
    %219 = vmatpush1.bf16.msra.mxu0 0
    %220 = vmatprep.subr.bf16.mxu0 0
    %221 = vmatpush1.bf16.msra.mxu0 0
    %222 = vmatprep.subr.bf16.mxu0 0
    %223 = vmatpush1.bf16.msra.mxu0 0
    %224 = vmatprep.subr.bf16.mxu0 0
    %225 = vmatpush1.bf16.msra.mxu0 0
    %226 = vmatprep.mubr.bf16.mxu0 0
    %227 = vmatmul.mubr.bf16.gmra.mrb[0].mxu0 %v110
    %v228 = vpop.f32.mrb[0].mxu0
    %v229 = vadd.f32 0.0, %v228
    %v230 = vpop.f32.mrb[0].mxu0
    %v231 = vadd.f32 0.0, %v230
    %v232 = vpop.f32.mrb[0].mxu0
    %v233 = vadd.f32 0.0, %v232
    %v234 = vpop.f32.mrb[0].mxu0
    %v235 = vadd.f32 0.0, %v234
    %236 = vmatprep.mubr.bf16.mxu0 0
    %237 = vmatmul.mubr.bf16.gmra.mrb[0].mxu0 %v111
    %v238 = vpop.f32.mrb[0].mxu0
    %v239 = vadd.f32 0.0, %v238
    %v240 = vpop.f32.mrb[0].mxu0
    %v241 = vadd.f32 0.0, %v240
    %v242 = vpop.f32.mrb[0].mxu0
    %v243 = vadd.f32 0.0, %v242
    %v244 = vpop.f32.mrb[0].mxu0
    %v245 = vadd.f32 0.0, %v244
    %246 = vdwg.mxu0
    %v247 = vlaneseq
    %v248 = vshrl.u32 %v247, 7
    %v249 = vsub.s32 0, %v248
    %v250 = vrot.slane %v104, %v249
    %v251 = vadd.f32 %v229, %v250
    %v252 = vadd.f32 %v233, %v250
    %v253 = vadd.f32 %v239, %v250
    %v254 = vadd.f32 %v243, %v250
    %v255 = vpack.c.bf16 %v252, %v251
    %v256 = vpack.c.bf16 %v254, %v253
    %v257 = vlaneseq
    %v258 = vshrl.u32 %v257, 7
    %v259 = vsub.s32 0, %v258
    %v260 = vrot.slane %v105, %v259
    %v261 = vadd.f32 %v231, %v260
    %v262 = vadd.f32 %v235, %v260
    %v263 = vadd.f32 %v241, %v260
    %v264 = vadd.f32 %v245, %v260
    %v265 = vpack.c.bf16 %v262, %v261
    %v266 = vpack.c.bf16 %v264, %v263
    %v267 = vlaneseq
    %v268 = vshrl.u32 %v267, 7
    %v269 = vsub.s32 0, %v268
    %v270 = vrot.slane %v106, %v269
    %v287 = vunpack.c.l.b16 %v73
    %v288 = vunpack.c.l.b16 %v75
    %v289 = vunpack.c.l.b16 %v77
    %v290 = vunpack.c.l.b16 %v79
    %v291 = vunpack.c.l.b16 %v81
    %v292 = vunpack.c.l.b16 %v83
    %v293 = vunpack.c.l.b16 %v85
    %v294 = vunpack.c.l.b16 %v87
    %v295 = vunpack.c.l.b16 %v89
    %v296 = vunpack.c.l.b16 %v91
    %v297 = vunpack.c.l.b16 %v93
    %v298 = vunpack.c.l.b16 %v95
    %v299 = vunpack.c.l.b16 %v97
    %v300 = vunpack.c.l.b16 %v99
    %v301 = vunpack.c.l.b16 %v101
    %v302 = vunpack.c.l.b16 %v103
    %v303 = vpack.c.b16 %v288, %v287
    %v304 = vpack.c.b16 %v290, %v289
    %v305 = vpack.c.b16 %v292, %v291
    %v306 = vpack.c.b16 %v294, %v293
    %v307 = vpack.c.b16 %v296, %v295
    %v308 = vpack.c.b16 %v298, %v297
    %v309 = vpack.c.b16 %v300, %v299
    %v310 = vpack.c.b16 %v302, %v301
    %319 = vmatprep.subr.bf16.mxu0 0
    %320 = vmatpush1.bf16.msra.mxu0 %v303
    %321 = vmatprep.subr.bf16.mxu0 0
    %322 = vmatpush1.bf16.msra.mxu0 %v304
    %323 = vmatprep.subr.bf16.mxu0 0
    %324 = vmatpush1.bf16.msra.mxu0 %v305
    %325 = vmatprep.subr.bf16.mxu0 0
    %326 = vmatpush1.bf16.msra.mxu0 %v306
    %327 = vmatprep.subr.bf16.mxu0 0
    %328 = vmatpush1.bf16.msra.mxu0 %v307
    %329 = vmatprep.subr.bf16.mxu0 0
    %330 = vmatpush1.bf16.msra.mxu0 %v308
    %331 = vmatprep.subr.bf16.mxu0 0
    %332 = vmatpush1.bf16.msra.mxu0 %v309
    %333 = vmatprep.subr.bf16.mxu0 0
    %334 = vmatpush1.bf16.msra.mxu0 %v310
    %335 = vmatprep.subr.bf16.mxu0 0
    %336 = vmatpush1.bf16.msra.mxu0 0
    %337 = vmatprep.subr.bf16.mxu0 0
    %338 = vmatpush1.bf16.msra.mxu0 0
    %339 = vmatprep.subr.bf16.mxu0 0
    %340 = vmatpush1.bf16.msra.mxu0 0
    %341 = vmatprep.subr.bf16.mxu0 0
    %342 = vmatpush1.bf16.msra.mxu0 0
    %343 = vmatprep.subr.bf16.mxu0 0
    %344 = vmatpush1.bf16.msra.mxu0 0
    %345 = vmatprep.subr.bf16.mxu0 0
    %346 = vmatpush1.bf16.msra.mxu0 0
    %347 = vmatprep.subr.bf16.mxu0 0
    %348 = vmatpush1.bf16.msra.mxu0 0
    %349 = vmatprep.subr.bf16.mxu0 0
    %350 = vmatpush1.bf16.msra.mxu0 0
    %351 = vmatprep.mubr.bf16.mxu0 0
    %352 = vmatmul.mubr.bf16.gmra.mrb[0].mxu0 %v112
    %v353 = vpop.f32.mrb[0].mxu0
    %v354 = vadd.f32 %v270, %v353
    %v355 = vpop.f32.mrb[0].mxu0
    %v356 = vpop.f32.mrb[0].mxu0
    %v357 = vadd.f32 %v270, %v356
    %v358 = vpop.f32.mrb[0].mxu0
    %359 = vmatprep.mubr.bf16.mxu0 0
    %360 = vmatmul.mubr.bf16.gmra.mrb[0].mxu0 %v113
    %v361 = vpop.f32.mrb[0].mxu0
    %v362 = vadd.f32 %v270, %v361
    %v363 = vpop.f32.mrb[0].mxu0
    %v364 = vpop.f32.mrb[0].mxu0
    %v365 = vadd.f32 %v270, %v364
    %v366 = vpop.f32.mrb[0].mxu0
    %367 = vdwg.mxu0
    %v368 = vpack.c.bf16 %v357, %v354
    %v369 = vpack.c.bf16 %v365, %v362
    %v370 = vlaneseq
    %v371 = vshrl.u32 %v370, 7
    %v372 = vsub.s32 0, %v371
    %v373 = vrot.slane %v107, %v372
    %vm374 = vcmask 261120
    %v376 = vsel %vm374, %v255, 0
    %v379 = vsel %vm374, %v265, 0
    %381 = vmatprep.subr.bf16.mxu0 0
    %382 = vmatpush1.bf16.xpose.msra.mxu0 %v379
    %383 = vmatprep.subr.bf16.mxu0 0
    %384 = vmatpush1.bf16.xpose.msra.mxu0 0
    %385 = vmatprep.subr.bf16.mxu0 0
    %386 = vmatpush1.bf16.xpose.msra.mxu0 0
    %387 = vmatprep.subr.bf16.mxu0 0
    %388 = vmatpush1.bf16.xpose.msra.mxu0 0
    %389 = vmatprep.subr.bf16.mxu0 0
    %390 = vmatpush1.bf16.xpose.msra.mxu0 0
    %391 = vmatprep.subr.bf16.mxu0 0
    %392 = vmatpush1.bf16.xpose.msra.mxu0 0
    %393 = vmatprep.subr.bf16.mxu0 0
    %394 = vmatpush1.bf16.xpose.msra.mxu0 0
    %395 = vmatprep.subr.bf16.mxu0 0
    %396 = vmatpush1.bf16.xpose.msra.mxu0 0
    %397 = vmatprep.subr.bf16.mxu0 0
    %398 = vmatpush1.bf16.xpose.msra.mxu0 0
    %399 = vmatprep.subr.bf16.mxu0 0
    %400 = vmatpush1.bf16.xpose.msra.mxu0 0
    %401 = vmatprep.subr.bf16.mxu0 0
    %402 = vmatpush1.bf16.xpose.msra.mxu0 0
    %403 = vmatprep.subr.bf16.mxu0 0
    %404 = vmatpush1.bf16.xpose.msra.mxu0 0
    %405 = vmatprep.subr.bf16.mxu0 0
    %406 = vmatpush1.bf16.xpose.msra.mxu0 0
    %407 = vmatprep.subr.bf16.mxu0 0
    %408 = vmatpush1.bf16.xpose.msra.mxu0 0
    %409 = vmatprep.subr.bf16.mxu0 0
    %410 = vmatpush1.bf16.xpose.msra.mxu0 0
    %411 = vmatprep.subr.bf16.mxu0 0
    %412 = vmatpush1.bf16.xpose.msra.mxu0 0
    %413 = vmatprep.mubr.bf16.mxu0 0
    %414 = vmatmul.mubr.bf16.gmra.mrb[0].mxu0 %v376
    %v415 = vpop.f32.mrb[0].mxu0
    %v416 = vadd.f32 0.0, %v415
    %v417 = vpop.f32.mrb[0].mxu0
    %v418 = vpop.f32.mrb[0].mxu0
    %v419 = vadd.f32 0.0, %v418
    %v420 = vpop.f32.mrb[0].mxu0
    %421 = vdwg.mxu0
    %vm422 = vcmask 130048
    %v423 = vsel %vm422, %v416, -inf
    %424 = vmax.xlane.f32.xlu0 %v423
    %v425 = vpop.xlane.xlu0 %424
    %v426 = vsel %vm422, %v419, -inf
    %427 = vmax.xlane.f32.xlu0 %v426
    %v428 = vpop.xlane.xlu0 %427
    %v429 = vsub.f32 %v416, %v425
    %v430 = vsub.f32 %v419, %v428
    %v431 = vmul.f32 %v429, 1.442695
    %v432 = vpow.pop %v431
    %v433 = vmul.f32 %v430, 1.442695
    %v434 = vpow.pop %v433
    %v435 = vsel %vm422, %v432, 0.0
    %436 = vadd.xlane.f32.xlu0 %v435
    %v437 = vpop.xlane.xlu0 %436
    %v438 = vsel %vm422, %v434, 0.0
    %439 = vadd.xlane.f32.xlu0 %v438
    %v440 = vpop.xlane.xlu0 %439
    %v441 = vrcp.pop %v437
    %v442 = vmul.f32 %v432, %v441
    %v443 = vrcp.pop %v440
    %v444 = vmul.f32 %v434, %v443
    %v445 = vpack.c.bf16 %v444, %v442
    %v447 = vsel %vm422, %v445, 0
    %449 = vmatprep.subr.bf16.mxu0 0
    %450 = vmatpush1.bf16.msra.mxu0 %v368
    %451 = vmatprep.subr.bf16.mxu0 0
    %452 = vmatpush1.bf16.msra.mxu0 0
    %453 = vmatprep.subr.bf16.mxu0 0
    %454 = vmatpush1.bf16.msra.mxu0 0
    %455 = vmatprep.subr.bf16.mxu0 0
    %456 = vmatpush1.bf16.msra.mxu0 0
    %457 = vmatprep.subr.bf16.mxu0 0
    %458 = vmatpush1.bf16.msra.mxu0 0
    %459 = vmatprep.subr.bf16.mxu0 0
    %460 = vmatpush1.bf16.msra.mxu0 0
    %461 = vmatprep.subr.bf16.mxu0 0
    %462 = vmatpush1.bf16.msra.mxu0 0
    %463 = vmatprep.subr.bf16.mxu0 0
    %464 = vmatpush1.bf16.msra.mxu0 0
    %465 = vmatprep.subr.bf16.mxu0 0
    %466 = vmatpush1.bf16.msra.mxu0 0
    %467 = vmatprep.subr.bf16.mxu0 0
    %468 = vmatpush1.bf16.msra.mxu0 0
    %469 = vmatprep.subr.bf16.mxu0 0
    %470 = vmatpush1.bf16.msra.mxu0 0
    %471 = vmatprep.subr.bf16.mxu0 0
    %472 = vmatpush1.bf16.msra.mxu0 0
    %473 = vmatprep.subr.bf16.mxu0 0
    %474 = vmatpush1.bf16.msra.mxu0 0
    %475 = vmatprep.subr.bf16.mxu0 0
    %476 = vmatpush1.bf16.msra.mxu0 0
    %477 = vmatprep.subr.bf16.mxu0 0
    %478 = vmatpush1.bf16.msra.mxu0 0
    %479 = vmatprep.subr.bf16.mxu0 0
    %480 = vmatpush1.bf16.msra.mxu0 0
    %481 = vmatprep.mubr.bf16.mxu0 0
    %482 = vmatmul.mubr.bf16.gmra.mrb[0].mxu0 %v447
    %v483 = vpop.f32.mrb[0].mxu0
    %v484 = vadd.f32 0.0, %v483
    %v485 = vpop.f32.mrb[0].mxu0
    %v486 = vpop.f32.mrb[0].mxu0
    %v487 = vadd.f32 0.0, %v486
    %v488 = vpop.f32.mrb[0].mxu0
    %489 = vdwg.mxu0
    %v490 = vpack.c.bf16 %v487, %v484
    %v491 = vunpack.c.h.b16 %v73
    %v492 = vunpack.c.h.b16 %v75
    %v493 = vunpack.c.h.b16 %v77
    %v494 = vunpack.c.h.b16 %v79
    %v495 = vpack.c.b16 %v492, %v491
    %v496 = vpack.c.b16 %v494, %v493
    %v500 = vsel %vm374, %v490, 0
    %502 = vmatprep.subr.bf16.mxu0 0
    %503 = vmatpush1.bf16.msra.mxu0 %v495
    %504 = vmatprep.subr.bf16.mxu0 0
    %505 = vmatpush1.bf16.msra.mxu0 %v496
    %506 = vmatprep.subr.bf16.mxu0 0
    %507 = vmatpush1.bf16.msra.mxu0 0
    %508 = vmatprep.subr.bf16.mxu0 0
    %509 = vmatpush1.bf16.msra.mxu0 0
    %510 = vmatprep.subr.bf16.mxu0 0
    %511 = vmatpush1.bf16.msra.mxu0 0
    %512 = vmatprep.subr.bf16.mxu0 0
    %513 = vmatpush1.bf16.msra.mxu0 0
    %514 = vmatprep.subr.bf16.mxu0 0
    %515 = vmatpush1.bf16.msra.mxu0 0
    %516 = vmatprep.subr.bf16.mxu0 0
    %517 = vmatpush1.bf16.msra.mxu0 0
    %518 = vmatprep.subr.bf16.mxu0 0
    %519 = vmatpush1.bf16.msra.mxu0 0
    %520 = vmatprep.subr.bf16.mxu0 0
    %521 = vmatpush1.bf16.msra.mxu0 0
    %522 = vmatprep.subr.bf16.mxu0 0
    %523 = vmatpush1.bf16.msra.mxu0 0
    %524 = vmatprep.subr.bf16.mxu0 0
    %525 = vmatpush1.bf16.msra.mxu0 0
    %526 = vmatprep.subr.bf16.mxu0 0
    %527 = vmatpush1.bf16.msra.mxu0 0
    %528 = vmatprep.subr.bf16.mxu0 0
    %529 = vmatpush1.bf16.msra.mxu0 0
    %530 = vmatprep.subr.bf16.mxu0 0
    %531 = vmatpush1.bf16.msra.mxu0 0
    %532 = vmatprep.subr.bf16.mxu0 0
    %533 = vmatpush1.bf16.msra.mxu0 0
    %534 = vmatprep.mubr.bf16.mxu0 0
    %535 = vmatmul.mubr.bf16.gmra.mrb[0].mxu0 %v500
    %v536 = vpop.f32.mrb[0].mxu0
    %v537 = vadd.f32 0.0, %v536
    %v538 = vpop.f32.mrb[0].mxu0
    %v539 = vpop.f32.mrb[0].mxu0
    %v540 = vadd.f32 0.0, %v539
    %v541 = vpop.f32.mrb[0].mxu0
    %542 = vdwg.mxu0
    %v543 = vadd.f32 %v373, %v537
    %v544 = vadd.f32 %v373, %v540
    %546 = vrot.lane.b32.xlu0 %v255, 96
    %v547 = vpop.permute.xlu0 %546
    %549 = vrot.lane.b32.xlu0 %v265, 96
    %v550 = vpop.permute.xlu0 %549
    %v552 = vsel %vm374, %v547, 0
    %v555 = vsel %vm374, %v550, 0
    %557 = vmatprep.subr.bf16.mxu0 0
    %558 = vmatpush1.bf16.xpose.msra.mxu0 %v555
    %559 = vmatprep.subr.bf16.mxu0 0
    %560 = vmatpush1.bf16.xpose.msra.mxu0 0
    %561 = vmatprep.subr.bf16.mxu0 0
    %562 = vmatpush1.bf16.xpose.msra.mxu0 0
    %563 = vmatprep.subr.bf16.mxu0 0
    %564 = vmatpush1.bf16.xpose.msra.mxu0 0
    %565 = vmatprep.subr.bf16.mxu0 0
    %566 = vmatpush1.bf16.xpose.msra.mxu0 0
    %567 = vmatprep.subr.bf16.mxu0 0
    %568 = vmatpush1.bf16.xpose.msra.mxu0 0
    %569 = vmatprep.subr.bf16.mxu0 0
    %570 = vmatpush1.bf16.xpose.msra.mxu0 0
    %571 = vmatprep.subr.bf16.mxu0 0
    %572 = vmatpush1.bf16.xpose.msra.mxu0 0
    %573 = vmatprep.subr.bf16.mxu0 0
    %574 = vmatpush1.bf16.xpose.msra.mxu0 0
    %575 = vmatprep.subr.bf16.mxu0 0
    %576 = vmatpush1.bf16.xpose.msra.mxu0 0
    %577 = vmatprep.subr.bf16.mxu0 0
    %578 = vmatpush1.bf16.xpose.msra.mxu0 0
    %579 = vmatprep.subr.bf16.mxu0 0
    %580 = vmatpush1.bf16.xpose.msra.mxu0 0
    %581 = vmatprep.subr.bf16.mxu0 0
    %582 = vmatpush1.bf16.xpose.msra.mxu0 0
    %583 = vmatprep.subr.bf16.mxu0 0
    %584 = vmatpush1.bf16.xpose.msra.mxu0 0
    %585 = vmatprep.subr.bf16.mxu0 0
    %586 = vmatpush1.bf16.xpose.msra.mxu0 0
    %587 = vmatprep.subr.bf16.mxu0 0
    %588 = vmatpush1.bf16.xpose.msra.mxu0 0
    %589 = vmatprep.mubr.bf16.mxu0 0
    %590 = vmatmul.mubr.bf16.gmra.mrb[0].mxu0 %v552
    %v591 = vpop.f32.mrb[0].mxu0
    %v592 = vadd.f32 0.0, %v591
    %v593 = vpop.f32.mrb[0].mxu0
    %v594 = vpop.f32.mrb[0].mxu0
    %v595 = vadd.f32 0.0, %v594
    %v596 = vpop.f32.mrb[0].mxu0
    %597 = vdwg.mxu0
    %v598 = vsel %vm422, %v592, -inf
    %599 = vmax.xlane.f32.xlu0 %v598
    %v600 = vpop.xlane.xlu0 %599
    %v601 = vsel %vm422, %v595, -inf
    %602 = vmax.xlane.f32.xlu0 %v601
    %v603 = vpop.xlane.xlu0 %602
    %v604 = vsub.f32 %v592, %v600
    %v605 = vsub.f32 %v595, %v603
    %v606 = vmul.f32 %v604, 1.442695
    %v607 = vpow.pop %v606
    %v608 = vmul.f32 %v605, 1.442695
    %v609 = vpow.pop %v608
    %v610 = vsel %vm422, %v607, 0.0
    %611 = vadd.xlane.f32.xlu0 %v610
    %v612 = vpop.xlane.xlu0 %611
    %v613 = vsel %vm422, %v609, 0.0
    %614 = vadd.xlane.f32.xlu0 %v613
    %v615 = vpop.xlane.xlu0 %614
    %v616 = vrcp.pop %v612
    %v617 = vmul.f32 %v607, %v616
    %v618 = vrcp.pop %v615
    %v619 = vmul.f32 %v609, %v618
    %v620 = vpack.c.bf16 %v619, %v617
    %622 = vrot.lane.b32.xlu0 %v368, 96
    %v623 = vpop.permute.xlu0 %622
    %v626 = vsel %vm422, %v620, 0
    %628 = vmatprep.subr.bf16.mxu0 0
    %629 = vmatpush1.bf16.msra.mxu0 %v623
    %630 = vmatprep.subr.bf16.mxu0 0
    %631 = vmatpush1.bf16.msra.mxu0 0
    %632 = vmatprep.subr.bf16.mxu0 0
    %633 = vmatpush1.bf16.msra.mxu0 0
    %634 = vmatprep.subr.bf16.mxu0 0
    %635 = vmatpush1.bf16.msra.mxu0 0
    %636 = vmatprep.subr.bf16.mxu0 0
    %637 = vmatpush1.bf16.msra.mxu0 0
    %638 = vmatprep.subr.bf16.mxu0 0
    %639 = vmatpush1.bf16.msra.mxu0 0
    %640 = vmatprep.subr.bf16.mxu0 0
    %641 = vmatpush1.bf16.msra.mxu0 0
    %642 = vmatprep.subr.bf16.mxu0 0
    %643 = vmatpush1.bf16.msra.mxu0 0
    %644 = vmatprep.subr.bf16.mxu0 0
    %645 = vmatpush1.bf16.msra.mxu0 0
    %646 = vmatprep.subr.bf16.mxu0 0
    %647 = vmatpush1.bf16.msra.mxu0 0
    %648 = vmatprep.subr.bf16.mxu0 0
    %649 = vmatpush1.bf16.msra.mxu0 0
    %650 = vmatprep.subr.bf16.mxu0 0
    %651 = vmatpush1.bf16.msra.mxu0 0
    %652 = vmatprep.subr.bf16.mxu0 0
    %653 = vmatpush1.bf16.msra.mxu0 0
    %654 = vmatprep.subr.bf16.mxu0 0
    %655 = vmatpush1.bf16.msra.mxu0 0
    %656 = vmatprep.subr.bf16.mxu0 0
    %657 = vmatpush1.bf16.msra.mxu0 0
    %658 = vmatprep.subr.bf16.mxu0 0
    %659 = vmatpush1.bf16.msra.mxu0 0
    %660 = vmatprep.mubr.bf16.mxu0 0
    %661 = vmatmul.mubr.bf16.gmra.mrb[0].mxu0 %v626
    %v662 = vpop.f32.mrb[0].mxu0
    %v663 = vadd.f32 0.0, %v662
    %v664 = vpop.f32.mrb[0].mxu0
    %v665 = vpop.f32.mrb[0].mxu0
    %v666 = vadd.f32 0.0, %v665
    %v667 = vpop.f32.mrb[0].mxu0
    %668 = vdwg.mxu0
    %v669 = vpack.c.bf16 %v666, %v663
    %v670 = vunpack.c.h.b16 %v81
    %v671 = vunpack.c.h.b16 %v83
    %v672 = vunpack.c.h.b16 %v85
    %v673 = vunpack.c.h.b16 %v87
    %v674 = vpack.c.b16 %v671, %v670
    %v675 = vpack.c.b16 %v673, %v672
    %v679 = vsel %vm374, %v669, 0
    %681 = vmatprep.subr.bf16.mxu0 0
    %682 = vmatpush1.bf16.msra.mxu0 %v674
    %683 = vmatprep.subr.bf16.mxu0 0
    %684 = vmatpush1.bf16.msra.mxu0 %v675
    %685 = vmatprep.subr.bf16.mxu0 0
    %686 = vmatpush1.bf16.msra.mxu0 0
    %687 = vmatprep.subr.bf16.mxu0 0
    %688 = vmatpush1.bf16.msra.mxu0 0
    %689 = vmatprep.subr.bf16.mxu0 0
    %690 = vmatpush1.bf16.msra.mxu0 0
    %691 = vmatprep.subr.bf16.mxu0 0
    %692 = vmatpush1.bf16.msra.mxu0 0
    %693 = vmatprep.subr.bf16.mxu0 0
    %694 = vmatpush1.bf16.msra.mxu0 0
    %695 = vmatprep.subr.bf16.mxu0 0
    %696 = vmatpush1.bf16.msra.mxu0 0
    %697 = vmatprep.subr.bf16.mxu0 0
    %698 = vmatpush1.bf16.msra.mxu0 0
    %699 = vmatprep.subr.bf16.mxu0 0
    %700 = vmatpush1.bf16.msra.mxu0 0
    %701 = vmatprep.subr.bf16.mxu0 0
    %702 = vmatpush1.bf16.msra.mxu0 0
    %703 = vmatprep.subr.bf16.mxu0 0
    %704 = vmatpush1.bf16.msra.mxu0 0
    %705 = vmatprep.subr.bf16.mxu0 0
    %706 = vmatpush1.bf16.msra.mxu0 0
    %707 = vmatprep.subr.bf16.mxu0 0
    %708 = vmatpush1.bf16.msra.mxu0 0
    %709 = vmatprep.subr.bf16.mxu0 0
    %710 = vmatpush1.bf16.msra.mxu0 0
    %711 = vmatprep.subr.bf16.mxu0 0
    %712 = vmatpush1.bf16.msra.mxu0 0
    %713 = vmatprep.mubr.bf16.mxu0 0
    %714 = vmatmul.mubr.bf16.gmra.mrb[0].mxu0 %v679
    %v715 = vpop.f32.mrb[0].mxu0
    %v716 = vadd.f32 0.0, %v715
    %v717 = vpop.f32.mrb[0].mxu0
    %v718 = vpop.f32.mrb[0].mxu0
    %v719 = vadd.f32 0.0, %v718
    %v720 = vpop.f32.mrb[0].mxu0
    %721 = vdwg.mxu0
    %v722 = vadd.f32 %v543, %v716
    %v723 = vadd.f32 %v544, %v719
    %724 = vrot.lane.b32.xlu0 %v255, 64
    %v725 = vpop.permute.xlu0 %724
    %726 = vrot.lane.b32.xlu0 %v265, 64
    %v727 = vpop.permute.xlu0 %726
    %v729 = vsel %vm374, %v725, 0
    %v732 = vsel %vm374, %v727, 0
    %734 = vmatprep.subr.bf16.mxu0 0
    %735 = vmatpush1.bf16.xpose.msra.mxu0 %v732
    %736 = vmatprep.subr.bf16.mxu0 0
    %737 = vmatpush1.bf16.xpose.msra.mxu0 0
    %738 = vmatprep.subr.bf16.mxu0 0
    %739 = vmatpush1.bf16.xpose.msra.mxu0 0
    %740 = vmatprep.subr.bf16.mxu0 0
    %741 = vmatpush1.bf16.xpose.msra.mxu0 0
    %742 = vmatprep.subr.bf16.mxu0 0
    %743 = vmatpush1.bf16.xpose.msra.mxu0 0
    %744 = vmatprep.subr.bf16.mxu0 0
    %745 = vmatpush1.bf16.xpose.msra.mxu0 0
    %746 = vmatprep.subr.bf16.mxu0 0
    %747 = vmatpush1.bf16.xpose.msra.mxu0 0
    %748 = vmatprep.subr.bf16.mxu0 0
    %749 = vmatpush1.bf16.xpose.msra.mxu0 0
    %750 = vmatprep.subr.bf16.mxu0 0
    %751 = vmatpush1.bf16.xpose.msra.mxu0 0
    %752 = vmatprep.subr.bf16.mxu0 0
    %753 = vmatpush1.bf16.xpose.msra.mxu0 0
    %754 = vmatprep.subr.bf16.mxu0 0
    %755 = vmatpush1.bf16.xpose.msra.mxu0 0
    %756 = vmatprep.subr.bf16.mxu0 0
    %757 = vmatpush1.bf16.xpose.msra.mxu0 0
    %758 = vmatprep.subr.bf16.mxu0 0
    %759 = vmatpush1.bf16.xpose.msra.mxu0 0
    %760 = vmatprep.subr.bf16.mxu0 0
    %761 = vmatpush1.bf16.xpose.msra.mxu0 0
    %762 = vmatprep.subr.bf16.mxu0 0
    %763 = vmatpush1.bf16.xpose.msra.mxu0 0
    %764 = vmatprep.subr.bf16.mxu0 0
    %765 = vmatpush1.bf16.xpose.msra.mxu0 0
    %766 = vmatprep.mubr.bf16.mxu0 0
    %767 = vmatmul.mubr.bf16.gmra.mrb[0].mxu0 %v729
    %v768 = vpop.f32.mrb[0].mxu0
    %v769 = vadd.f32 0.0, %v768
    %v770 = vpop.f32.mrb[0].mxu0
    %v771 = vpop.f32.mrb[0].mxu0
    %v772 = vadd.f32 0.0, %v771
    %v773 = vpop.f32.mrb[0].mxu0
    %774 = vdwg.mxu0
    %v775 = vsel %vm422, %v769, -inf
    %776 = vmax.xlane.f32.xlu0 %v775
    %v777 = vpop.xlane.xlu0 %776
    %v778 = vsel %vm422, %v772, -inf
    %779 = vmax.xlane.f32.xlu0 %v778
    %v780 = vpop.xlane.xlu0 %779
    %v781 = vsub.f32 %v769, %v777
    %v782 = vsub.f32 %v772, %v780
    %v783 = vmul.f32 %v781, 1.442695
    %v784 = vpow.pop %v783
    %v785 = vmul.f32 %v782, 1.442695
    %v786 = vpow.pop %v785
    %v787 = vsel %vm422, %v784, 0.0
    %788 = vadd.xlane.f32.xlu0 %v787
    %v789 = vpop.xlane.xlu0 %788
    %v790 = vsel %vm422, %v786, 0.0
    %791 = vadd.xlane.f32.xlu0 %v790
    %v792 = vpop.xlane.xlu0 %791
    %v793 = vrcp.pop %v789
    %v794 = vmul.f32 %v784, %v793
    %v795 = vrcp.pop %v792
    %v796 = vmul.f32 %v786, %v795
    %v797 = vpack.c.bf16 %v796, %v794
    %798 = vrot.lane.b32.xlu0 %v368, 64
    %v799 = vpop.permute.xlu0 %798
    %v802 = vsel %vm422, %v797, 0
    %804 = vmatprep.subr.bf16.mxu0 0
    %805 = vmatpush1.bf16.msra.mxu0 %v799
    %806 = vmatprep.subr.bf16.mxu0 0
    %807 = vmatpush1.bf16.msra.mxu0 0
    %808 = vmatprep.subr.bf16.mxu0 0
    %809 = vmatpush1.bf16.msra.mxu0 0
    %810 = vmatprep.subr.bf16.mxu0 0
    %811 = vmatpush1.bf16.msra.mxu0 0
    %812 = vmatprep.subr.bf16.mxu0 0
    %813 = vmatpush1.bf16.msra.mxu0 0
    %814 = vmatprep.subr.bf16.mxu0 0
    %815 = vmatpush1.bf16.msra.mxu0 0
    %816 = vmatprep.subr.bf16.mxu0 0
    %817 = vmatpush1.bf16.msra.mxu0 0
    %818 = vmatprep.subr.bf16.mxu0 0
    %819 = vmatpush1.bf16.msra.mxu0 0
    %820 = vmatprep.subr.bf16.mxu0 0
    %821 = vmatpush1.bf16.msra.mxu0 0
    %822 = vmatprep.subr.bf16.mxu0 0
    %823 = vmatpush1.bf16.msra.mxu0 0
    %824 = vmatprep.subr.bf16.mxu0 0
    %825 = vmatpush1.bf16.msra.mxu0 0
    %826 = vmatprep.subr.bf16.mxu0 0
    %827 = vmatpush1.bf16.msra.mxu0 0
    %828 = vmatprep.subr.bf16.mxu0 0
    %829 = vmatpush1.bf16.msra.mxu0 0
    %830 = vmatprep.subr.bf16.mxu0 0
    %831 = vmatpush1.bf16.msra.mxu0 0
    %832 = vmatprep.subr.bf16.mxu0 0
    %833 = vmatpush1.bf16.msra.mxu0 0
    %834 = vmatprep.subr.bf16.mxu0 0
    %835 = vmatpush1.bf16.msra.mxu0 0
    %836 = vmatprep.mubr.bf16.mxu0 0
    %837 = vmatmul.mubr.bf16.gmra.mrb[0].mxu0 %v802
    %v838 = vpop.f32.mrb[0].mxu0
    %v839 = vadd.f32 0.0, %v838
    %v840 = vpop.f32.mrb[0].mxu0
    %v841 = vpop.f32.mrb[0].mxu0
    %v842 = vadd.f32 0.0, %v841
    %v843 = vpop.f32.mrb[0].mxu0
    %844 = vdwg.mxu0
    %v845 = vpack.c.bf16 %v842, %v839
    %v846 = vunpack.c.h.b16 %v89
    %v847 = vunpack.c.h.b16 %v91
    %v848 = vunpack.c.h.b16 %v93
    %v849 = vunpack.c.h.b16 %v95
    %v850 = vpack.c.b16 %v847, %v846
    %v851 = vpack.c.b16 %v849, %v848
    %v855 = vsel %vm374, %v845, 0
    %857 = vmatprep.subr.bf16.mxu0 0
    %858 = vmatpush1.bf16.msra.mxu0 %v850
    %859 = vmatprep.subr.bf16.mxu0 0
    %860 = vmatpush1.bf16.msra.mxu0 %v851
    %861 = vmatprep.subr.bf16.mxu0 0
    %862 = vmatpush1.bf16.msra.mxu0 0
    %863 = vmatprep.subr.bf16.mxu0 0
    %864 = vmatpush1.bf16.msra.mxu0 0
    %865 = vmatprep.subr.bf16.mxu0 0
    %866 = vmatpush1.bf16.msra.mxu0 0
    %867 = vmatprep.subr.bf16.mxu0 0
    %868 = vmatpush1.bf16.msra.mxu0 0
    %869 = vmatprep.subr.bf16.mxu0 0
    %870 = vmatpush1.bf16.msra.mxu0 0
    %871 = vmatprep.subr.bf16.mxu0 0
    %872 = vmatpush1.bf16.msra.mxu0 0
    %873 = vmatprep.subr.bf16.mxu0 0
    %874 = vmatpush1.bf16.msra.mxu0 0
    %875 = vmatprep.subr.bf16.mxu0 0
    %876 = vmatpush1.bf16.msra.mxu0 0
    %877 = vmatprep.subr.bf16.mxu0 0
    %878 = vmatpush1.bf16.msra.mxu0 0
    %879 = vmatprep.subr.bf16.mxu0 0
    %880 = vmatpush1.bf16.msra.mxu0 0
    %881 = vmatprep.subr.bf16.mxu0 0
    %882 = vmatpush1.bf16.msra.mxu0 0
    %883 = vmatprep.subr.bf16.mxu0 0
    %884 = vmatpush1.bf16.msra.mxu0 0
    %885 = vmatprep.subr.bf16.mxu0 0
    %886 = vmatpush1.bf16.msra.mxu0 0
    %887 = vmatprep.subr.bf16.mxu0 0
    %888 = vmatpush1.bf16.msra.mxu0 0
    %889 = vmatprep.mubr.bf16.mxu0 0
    %890 = vmatmul.mubr.bf16.gmra.mrb[0].mxu0 %v855
    %v891 = vpop.f32.mrb[0].mxu0
    %v892 = vadd.f32 0.0, %v891
    %v893 = vpop.f32.mrb[0].mxu0
    %v894 = vpop.f32.mrb[0].mxu0
    %v895 = vadd.f32 0.0, %v894
    %v896 = vpop.f32.mrb[0].mxu0
    %897 = vdwg.mxu0
    %v898 = vadd.f32 %v722, %v892
    %v899 = vadd.f32 %v723, %v895
    %900 = vrot.lane.b32.xlu0 %v255, 32
    %v901 = vpop.permute.xlu0 %900
    %902 = vrot.lane.b32.xlu0 %v265, 32
    %v903 = vpop.permute.xlu0 %902
    %v905 = vsel %vm374, %v901, 0
    %v908 = vsel %vm374, %v903, 0
    %910 = vmatprep.subr.bf16.mxu0 0
    %911 = vmatpush1.bf16.xpose.msra.mxu0 %v908
    %912 = vmatprep.subr.bf16.mxu0 0
    %913 = vmatpush1.bf16.xpose.msra.mxu0 0
    %914 = vmatprep.subr.bf16.mxu0 0
    %915 = vmatpush1.bf16.xpose.msra.mxu0 0
    %916 = vmatprep.subr.bf16.mxu0 0
    %917 = vmatpush1.bf16.xpose.msra.mxu0 0
    %918 = vmatprep.subr.bf16.mxu0 0
    %919 = vmatpush1.bf16.xpose.msra.mxu0 0
    %920 = vmatprep.subr.bf16.mxu0 0
    %921 = vmatpush1.bf16.xpose.msra.mxu0 0
    %922 = vmatprep.subr.bf16.mxu0 0
    %923 = vmatpush1.bf16.xpose.msra.mxu0 0
    %924 = vmatprep.subr.bf16.mxu0 0
    %925 = vmatpush1.bf16.xpose.msra.mxu0 0
    %926 = vmatprep.subr.bf16.mxu0 0
    %927 = vmatpush1.bf16.xpose.msra.mxu0 0
    %928 = vmatprep.subr.bf16.mxu0 0
    %929 = vmatpush1.bf16.xpose.msra.mxu0 0
    %930 = vmatprep.subr.bf16.mxu0 0
    %931 = vmatpush1.bf16.xpose.msra.mxu0 0
    %932 = vmatprep.subr.bf16.mxu0 0
    %933 = vmatpush1.bf16.xpose.msra.mxu0 0
    %934 = vmatprep.subr.bf16.mxu0 0
    %935 = vmatpush1.bf16.xpose.msra.mxu0 0
    %936 = vmatprep.subr.bf16.mxu0 0
    %937 = vmatpush1.bf16.xpose.msra.mxu0 0
    %938 = vmatprep.subr.bf16.mxu0 0
    %939 = vmatpush1.bf16.xpose.msra.mxu0 0
    %940 = vmatprep.subr.bf16.mxu0 0
    %941 = vmatpush1.bf16.xpose.msra.mxu0 0
    %942 = vmatprep.mubr.bf16.mxu0 0
    %943 = vmatmul.mubr.bf16.gmra.mrb[0].mxu0 %v905
    %v944 = vpop.f32.mrb[0].mxu0
    %v945 = vadd.f32 0.0, %v944
    %v946 = vpop.f32.mrb[0].mxu0
    %v947 = vpop.f32.mrb[0].mxu0
    %v948 = vadd.f32 0.0, %v947
    %v949 = vpop.f32.mrb[0].mxu0
    %950 = vdwg.mxu0
    %v951 = vsel %vm422, %v945, -inf
    %952 = vmax.xlane.f32.xlu0 %v951
    %v953 = vpop.xlane.xlu0 %952
    %v954 = vsel %vm422, %v948, -inf
    %955 = vmax.xlane.f32.xlu0 %v954
    %v956 = vpop.xlane.xlu0 %955
    %v957 = vsub.f32 %v945, %v953
    %v958 = vsub.f32 %v948, %v956
    %v959 = vmul.f32 %v957, 1.442695
    %v960 = vpow.pop %v959
    %v961 = vmul.f32 %v958, 1.442695
    %v962 = vpow.pop %v961
    %v963 = vsel %vm422, %v960, 0.0
    %964 = vadd.xlane.f32.xlu0 %v963
    %v965 = vpop.xlane.xlu0 %964
    %v966 = vsel %vm422, %v962, 0.0
    %967 = vadd.xlane.f32.xlu0 %v966
    %v968 = vpop.xlane.xlu0 %967
    %v969 = vrcp.pop %v965
    %v970 = vmul.f32 %v960, %v969
    %v971 = vrcp.pop %v968
    %v972 = vmul.f32 %v962, %v971
    %v973 = vpack.c.bf16 %v972, %v970
    %974 = vrot.lane.b32.xlu0 %v368, 32
    %v975 = vpop.permute.xlu0 %974
    %v978 = vsel %vm422, %v973, 0
    %980 = vmatprep.subr.bf16.mxu0 0
    %981 = vmatpush1.bf16.msra.mxu0 %v975
    %982 = vmatprep.subr.bf16.mxu0 0
    %983 = vmatpush1.bf16.msra.mxu0 0
    %984 = vmatprep.subr.bf16.mxu0 0
    %985 = vmatpush1.bf16.msra.mxu0 0
    %986 = vmatprep.subr.bf16.mxu0 0
    %987 = vmatpush1.bf16.msra.mxu0 0
    %988 = vmatprep.subr.bf16.mxu0 0
    %989 = vmatpush1.bf16.msra.mxu0 0
    %990 = vmatprep.subr.bf16.mxu0 0
    %991 = vmatpush1.bf16.msra.mxu0 0
    %992 = vmatprep.subr.bf16.mxu0 0
    %993 = vmatpush1.bf16.msra.mxu0 0
    %994 = vmatprep.subr.bf16.mxu0 0
    %995 = vmatpush1.bf16.msra.mxu0 0
    %996 = vmatprep.subr.bf16.mxu0 0
    %997 = vmatpush1.bf16.msra.mxu0 0
    %998 = vmatprep.subr.bf16.mxu0 0
    %999 = vmatpush1.bf16.msra.mxu0 0
    %1000 = vmatprep.subr.bf16.mxu0 0
    %1001 = vmatpush1.bf16.msra.mxu0 0
    %1002 = vmatprep.subr.bf16.mxu0 0
    %1003 = vmatpush1.bf16.msra.mxu0 0
    %1004 = vmatprep.subr.bf16.mxu0 0
    %1005 = vmatpush1.bf16.msra.mxu0 0
    %1006 = vmatprep.subr.bf16.mxu0 0
    %1007 = vmatpush1.bf16.msra.mxu0 0
    %1008 = vmatprep.subr.bf16.mxu0 0
    %1009 = vmatpush1.bf16.msra.mxu0 0
    %1010 = vmatprep.subr.bf16.mxu0 0
    %1011 = vmatpush1.bf16.msra.mxu0 0
    %1012 = vmatprep.mubr.bf16.mxu0 0
    %1013 = vmatmul.mubr.bf16.gmra.mrb[0].mxu0 %v978
    %v1014 = vpop.f32.mrb[0].mxu0
    %v1015 = vadd.f32 0.0, %v1014
    %v1016 = vpop.f32.mrb[0].mxu0
    %v1017 = vpop.f32.mrb[0].mxu0
    %v1018 = vadd.f32 0.0, %v1017
    %v1019 = vpop.f32.mrb[0].mxu0
    %1020 = vdwg.mxu0
    %v1021 = vpack.c.bf16 %v1018, %v1015
    %v1022 = vunpack.c.h.b16 %v97
    %v1023 = vunpack.c.h.b16 %v99
    %v1024 = vunpack.c.h.b16 %v101
    %v1025 = vunpack.c.h.b16 %v103
    %v1026 = vpack.c.b16 %v1023, %v1022
    %v1027 = vpack.c.b16 %v1025, %v1024
    %v1031 = vsel %vm374, %v1021, 0
    %1033 = vmatprep.subr.bf16.mxu0 0
    %1034 = vmatpush1.bf16.msra.mxu0 %v1026
    %1035 = vmatprep.subr.bf16.mxu0 0
    %1036 = vmatpush1.bf16.msra.mxu0 %v1027
    %1037 = vmatprep.subr.bf16.mxu0 0
    %1038 = vmatpush1.bf16.msra.mxu0 0
    %1039 = vmatprep.subr.bf16.mxu0 0
    %1040 = vmatpush1.bf16.msra.mxu0 0
    %1041 = vmatprep.subr.bf16.mxu0 0
    %1042 = vmatpush1.bf16.msra.mxu0 0
    %1043 = vmatprep.subr.bf16.mxu0 0
    %1044 = vmatpush1.bf16.msra.mxu0 0
    %1045 = vmatprep.subr.bf16.mxu0 0
    %1046 = vmatpush1.bf16.msra.mxu0 0
    %1047 = vmatprep.subr.bf16.mxu0 0
    %1048 = vmatpush1.bf16.msra.mxu0 0
    %1049 = vmatprep.subr.bf16.mxu0 0
    %1050 = vmatpush1.bf16.msra.mxu0 0
    %1051 = vmatprep.subr.bf16.mxu0 0
    %1052 = vmatpush1.bf16.msra.mxu0 0
    %1053 = vmatprep.subr.bf16.mxu0 0
    %1054 = vmatpush1.bf16.msra.mxu0 0
    %1055 = vmatprep.subr.bf16.mxu0 0
    %1056 = vmatpush1.bf16.msra.mxu0 0
    %1057 = vmatprep.subr.bf16.mxu0 0
    %1058 = vmatpush1.bf16.msra.mxu0 0
    %1059 = vmatprep.subr.bf16.mxu0 0
    %1060 = vmatpush1.bf16.msra.mxu0 0
    %1061 = vmatprep.subr.bf16.mxu0 0
    %1062 = vmatpush1.bf16.msra.mxu0 0
    %1063 = vmatprep.subr.bf16.mxu0 0
    %1064 = vmatpush1.bf16.msra.mxu0 0
    %1065 = vmatprep.mubr.bf16.mxu0 0
    %1066 = vmatmul.mubr.bf16.gmra.mrb[0].mxu0 %v1031
    %v1067 = vpop.f32.mrb[0].mxu0
    %v1068 = vadd.f32 0.0, %v1067
    %v1069 = vpop.f32.mrb[0].mxu0
    %v1070 = vpop.f32.mrb[0].mxu0
    %v1071 = vadd.f32 0.0, %v1070
    %v1072 = vpop.f32.mrb[0].mxu0
    %1073 = vdwg.mxu0
    %v1074 = vadd.f32 %v898, %v1068
    %v1075 = vadd.f32 %v899, %v1071
    %v1077 = vsel %vm374, %v256, 0
    %v1080 = vsel %vm374, %v266, 0
    %1082 = vmatprep.subr.bf16.mxu0 0
    %1083 = vmatpush1.bf16.xpose.msra.mxu0 %v1080
    %1084 = vmatprep.subr.bf16.mxu0 0
    %1085 = vmatpush1.bf16.xpose.msra.mxu0 0
    %1086 = vmatprep.subr.bf16.mxu0 0
    %1087 = vmatpush1.bf16.xpose.msra.mxu0 0
    %1088 = vmatprep.subr.bf16.mxu0 0
    %1089 = vmatpush1.bf16.xpose.msra.mxu0 0
    %1090 = vmatprep.subr.bf16.mxu0 0
    %1091 = vmatpush1.bf16.xpose.msra.mxu0 0
    %1092 = vmatprep.subr.bf16.mxu0 0
    %1093 = vmatpush1.bf16.xpose.msra.mxu0 0
    %1094 = vmatprep.subr.bf16.mxu0 0
    %1095 = vmatpush1.bf16.xpose.msra.mxu0 0
    %1096 = vmatprep.subr.bf16.mxu0 0
    %1097 = vmatpush1.bf16.xpose.msra.mxu0 0
    %1098 = vmatprep.subr.bf16.mxu0 0
    %1099 = vmatpush1.bf16.xpose.msra.mxu0 0
    %1100 = vmatprep.subr.bf16.mxu0 0
    %1101 = vmatpush1.bf16.xpose.msra.mxu0 0
    %1102 = vmatprep.subr.bf16.mxu0 0
    %1103 = vmatpush1.bf16.xpose.msra.mxu0 0
    %1104 = vmatprep.subr.bf16.mxu0 0
    %1105 = vmatpush1.bf16.xpose.msra.mxu0 0
    %1106 = vmatprep.subr.bf16.mxu0 0
    %1107 = vmatpush1.bf16.xpose.msra.mxu0 0
    %1108 = vmatprep.subr.bf16.mxu0 0
    %1109 = vmatpush1.bf16.xpose.msra.mxu0 0
    %1110 = vmatprep.subr.bf16.mxu0 0
    %1111 = vmatpush1.bf16.xpose.msra.mxu0 0
    %1112 = vmatprep.subr.bf16.mxu0 0
    %1113 = vmatpush1.bf16.xpose.msra.mxu0 0
    %1114 = vmatprep.mubr.bf16.mxu0 0
    %1115 = vmatmul.mubr.bf16.gmra.mrb[0].mxu0 %v1077
    %v1116 = vpop.f32.mrb[0].mxu0
    %v1117 = vadd.f32 0.0, %v1116
    %v1118 = vpop.f32.mrb[0].mxu0
    %v1119 = vpop.f32.mrb[0].mxu0
    %v1120 = vadd.f32 0.0, %v1119
    %v1121 = vpop.f32.mrb[0].mxu0
    %1122 = vdwg.mxu0
    %v1123 = vsel %vm422, %v1117, -inf
    %1124 = vmax.xlane.f32.xlu0 %v1123
    %v1125 = vpop.xlane.xlu0 %1124
    %v1126 = vsel %vm422, %v1120, -inf
    %1127 = vmax.xlane.f32.xlu0 %v1126
    %v1128 = vpop.xlane.xlu0 %1127
    %v1129 = vsub.f32 %v1117, %v1125
    %v1130 = vsub.f32 %v1120, %v1128
    %v1131 = vmul.f32 %v1129, 1.442695
    %v1132 = vpow.pop %v1131
    %v1133 = vmul.f32 %v1130, 1.442695
    %v1134 = vpow.pop %v1133
    %v1135 = vsel %vm422, %v1132, 0.0
    %1136 = vadd.xlane.f32.xlu0 %v1135
    %v1137 = vpop.xlane.xlu0 %1136
    %v1138 = vsel %vm422, %v1134, 0.0
    %1139 = vadd.xlane.f32.xlu0 %v1138
    %v1140 = vpop.xlane.xlu0 %1139
    %v1141 = vrcp.pop %v1137
    %v1142 = vmul.f32 %v1132, %v1141
    %v1143 = vrcp.pop %v1140
    %v1144 = vmul.f32 %v1134, %v1143
    %v1145 = vpack.c.bf16 %v1144, %v1142
    %v1147 = vsel %vm422, %v1145, 0
    %1149 = vmatprep.subr.bf16.mxu0 0
    %1150 = vmatpush1.bf16.msra.mxu0 %v369
    %1151 = vmatprep.subr.bf16.mxu0 0
    %1152 = vmatpush1.bf16.msra.mxu0 0
    %1153 = vmatprep.subr.bf16.mxu0 0
    %1154 = vmatpush1.bf16.msra.mxu0 0
    %1155 = vmatprep.subr.bf16.mxu0 0
    %1156 = vmatpush1.bf16.msra.mxu0 0
    %1157 = vmatprep.subr.bf16.mxu0 0
    %1158 = vmatpush1.bf16.msra.mxu0 0
    %1159 = vmatprep.subr.bf16.mxu0 0
    %1160 = vmatpush1.bf16.msra.mxu0 0
    %1161 = vmatprep.subr.bf16.mxu0 0
    %1162 = vmatpush1.bf16.msra.mxu0 0
    %1163 = vmatprep.subr.bf16.mxu0 0
    %1164 = vmatpush1.bf16.msra.mxu0 0
    %1165 = vmatprep.subr.bf16.mxu0 0
    %1166 = vmatpush1.bf16.msra.mxu0 0
    %1167 = vmatprep.subr.bf16.mxu0 0
    %1168 = vmatpush1.bf16.msra.mxu0 0
    %1169 = vmatprep.subr.bf16.mxu0 0
    %1170 = vmatpush1.bf16.msra.mxu0 0
    %1171 = vmatprep.subr.bf16.mxu0 0
    %1172 = vmatpush1.bf16.msra.mxu0 0
    %1173 = vmatprep.subr.bf16.mxu0 0
    %1174 = vmatpush1.bf16.msra.mxu0 0
    %1175 = vmatprep.subr.bf16.mxu0 0
    %1176 = vmatpush1.bf16.msra.mxu0 0
    %1177 = vmatprep.subr.bf16.mxu0 0
    %1178 = vmatpush1.bf16.msra.mxu0 0
    %1179 = vmatprep.subr.bf16.mxu0 0
    %1180 = vmatpush1.bf16.msra.mxu0 0
    %1181 = vmatprep.mubr.bf16.mxu0 0
    %1182 = vmatmul.mubr.bf16.gmra.mrb[0].mxu0 %v1147
    %v1183 = vpop.f32.mrb[0].mxu0
    %v1184 = vadd.f32 0.0, %v1183
    %v1185 = vpop.f32.mrb[0].mxu0
    %v1186 = vpop.f32.mrb[0].mxu0
    %v1187 = vadd.f32 0.0, %v1186
    %v1188 = vpop.f32.mrb[0].mxu0
    %1189 = vdwg.mxu0
    %v1190 = vpack.c.bf16 %v1187, %v1184
    %v1192 = vsel %vm374, %v1190, 0
    %1194 = vmatprep.subr.bf16.mxu0 0
    %1195 = vmatpush1.bf16.msra.mxu0 %v495
    %1196 = vmatprep.subr.bf16.mxu0 0
    %1197 = vmatpush1.bf16.msra.mxu0 %v496
    %1198 = vmatprep.subr.bf16.mxu0 0
    %1199 = vmatpush1.bf16.msra.mxu0 0
    %1200 = vmatprep.subr.bf16.mxu0 0
    %1201 = vmatpush1.bf16.msra.mxu0 0
    %1202 = vmatprep.subr.bf16.mxu0 0
    %1203 = vmatpush1.bf16.msra.mxu0 0
    %1204 = vmatprep.subr.bf16.mxu0 0
    %1205 = vmatpush1.bf16.msra.mxu0 0
    %1206 = vmatprep.subr.bf16.mxu0 0
    %1207 = vmatpush1.bf16.msra.mxu0 0
    %1208 = vmatprep.subr.bf16.mxu0 0
    %1209 = vmatpush1.bf16.msra.mxu0 0
    %1210 = vmatprep.subr.bf16.mxu0 0
    %1211 = vmatpush1.bf16.msra.mxu0 0
    %1212 = vmatprep.subr.bf16.mxu0 0
    %1213 = vmatpush1.bf16.msra.mxu0 0
    %1214 = vmatprep.subr.bf16.mxu0 0
    %1215 = vmatpush1.bf16.msra.mxu0 0
    %1216 = vmatprep.subr.bf16.mxu0 0
    %1217 = vmatpush1.bf16.msra.mxu0 0
    %1218 = vmatprep.subr.bf16.mxu0 0
    %1219 = vmatpush1.bf16.msra.mxu0 0
    %1220 = vmatprep.subr.bf16.mxu0 0
    %1221 = vmatpush1.bf16.msra.mxu0 0
    %1222 = vmatprep.subr.bf16.mxu0 0
    %1223 = vmatpush1.bf16.msra.mxu0 0
    %1224 = vmatprep.subr.bf16.mxu0 0
    %1225 = vmatpush1.bf16.msra.mxu0 0
    %1226 = vmatprep.mubr.bf16.mxu0 0
    %1227 = vmatmul.mubr.bf16.gmra.mrb[0].mxu0 %v1192
    %v1228 = vpop.f32.mrb[0].mxu0
    %v1229 = vadd.f32 0.0, %v1228
    %v1230 = vpop.f32.mrb[0].mxu0
    %v1231 = vpop.f32.mrb[0].mxu0
    %v1232 = vadd.f32 0.0, %v1231
    %v1233 = vpop.f32.mrb[0].mxu0
    %1234 = vdwg.mxu0
    %v1235 = vadd.f32 %v373, %v1229
    %v1236 = vadd.f32 %v373, %v1232
    %1238 = vrot.lane.b32.xlu0 %v256, 96
    %v1239 = vpop.permute.xlu0 %1238
    %1241 = vrot.lane.b32.xlu0 %v266, 96
    %v1242 = vpop.permute.xlu0 %1241
    %v1244 = vsel %vm374, %v1239, 0
    %v1247 = vsel %vm374, %v1242, 0
    %1249 = vmatprep.subr.bf16.mxu0 0
    %1250 = vmatpush1.bf16.xpose.msra.mxu0 %v1247
    %1251 = vmatprep.subr.bf16.mxu0 0
    %1252 = vmatpush1.bf16.xpose.msra.mxu0 0
    %1253 = vmatprep.subr.bf16.mxu0 0
    %1254 = vmatpush1.bf16.xpose.msra.mxu0 0
    %1255 = vmatprep.subr.bf16.mxu0 0
    %1256 = vmatpush1.bf16.xpose.msra.mxu0 0
    %1257 = vmatprep.subr.bf16.mxu0 0
    %1258 = vmatpush1.bf16.xpose.msra.mxu0 0
    %1259 = vmatprep.subr.bf16.mxu0 0
    %1260 = vmatpush1.bf16.xpose.msra.mxu0 0
    %1261 = vmatprep.subr.bf16.mxu0 0
    %1262 = vmatpush1.bf16.xpose.msra.mxu0 0
    %1263 = vmatprep.subr.bf16.mxu0 0
    %1264 = vmatpush1.bf16.xpose.msra.mxu0 0
    %1265 = vmatprep.subr.bf16.mxu0 0
    %1266 = vmatpush1.bf16.xpose.msra.mxu0 0
    %1267 = vmatprep.subr.bf16.mxu0 0
    %1268 = vmatpush1.bf16.xpose.msra.mxu0 0
    %1269 = vmatprep.subr.bf16.mxu0 0
    %1270 = vmatpush1.bf16.xpose.msra.mxu0 0
    %1271 = vmatprep.subr.bf16.mxu0 0
    %1272 = vmatpush1.bf16.xpose.msra.mxu0 0
    %1273 = vmatprep.subr.bf16.mxu0 0
    %1274 = vmatpush1.bf16.xpose.msra.mxu0 0
    %1275 = vmatprep.subr.bf16.mxu0 0
    %1276 = vmatpush1.bf16.xpose.msra.mxu0 0
    %1277 = vmatprep.subr.bf16.mxu0 0
    %1278 = vmatpush1.bf16.xpose.msra.mxu0 0
    %1279 = vmatprep.subr.bf16.mxu0 0
    %1280 = vmatpush1.bf16.xpose.msra.mxu0 0
    %1281 = vmatprep.mubr.bf16.mxu0 0
    %1282 = vmatmul.mubr.bf16.gmra.mrb[0].mxu0 %v1244
    %v1283 = vpop.f32.mrb[0].mxu0
    %v1284 = vadd.f32 0.0, %v1283
    %v1285 = vpop.f32.mrb[0].mxu0
    %v1286 = vpop.f32.mrb[0].mxu0
    %v1287 = vadd.f32 0.0, %v1286
    %v1288 = vpop.f32.mrb[0].mxu0
    %1289 = vdwg.mxu0
    %v1290 = vsel %vm422, %v1284, -inf
    %1291 = vmax.xlane.f32.xlu0 %v1290
    %v1292 = vpop.xlane.xlu0 %1291
    %v1293 = vsel %vm422, %v1287, -inf
    %1294 = vmax.xlane.f32.xlu0 %v1293
    %v1295 = vpop.xlane.xlu0 %1294
    %v1296 = vsub.f32 %v1284, %v1292
    %v1297 = vsub.f32 %v1287, %v1295
    %v1298 = vmul.f32 %v1296, 1.442695
    %v1299 = vpow.pop %v1298
    %v1300 = vmul.f32 %v1297, 1.442695
    %v1301 = vpow.pop %v1300
    %v1302 = vsel %vm422, %v1299, 0.0
    %1303 = vadd.xlane.f32.xlu0 %v1302
    %v1304 = vpop.xlane.xlu0 %1303
    %v1305 = vsel %vm422, %v1301, 0.0
    %1306 = vadd.xlane.f32.xlu0 %v1305
    %v1307 = vpop.xlane.xlu0 %1306
    %v1308 = vrcp.pop %v1304
    %v1309 = vmul.f32 %v1299, %v1308
    %v1310 = vrcp.pop %v1307
    %v1311 = vmul.f32 %v1301, %v1310
    %v1312 = vpack.c.bf16 %v1311, %v1309
    %1314 = vrot.lane.b32.xlu0 %v369, 96
    %v1315 = vpop.permute.xlu0 %1314
    %v1318 = vsel %vm422, %v1312, 0
    %1320 = vmatprep.subr.bf16.mxu0 0
    %1321 = vmatpush1.bf16.msra.mxu0 %v1315
    %1322 = vmatprep.subr.bf16.mxu0 0
    %1323 = vmatpush1.bf16.msra.mxu0 0
    %1324 = vmatprep.subr.bf16.mxu0 0
    %1325 = vmatpush1.bf16.msra.mxu0 0
    %1326 = vmatprep.subr.bf16.mxu0 0
    %1327 = vmatpush1.bf16.msra.mxu0 0
    %1328 = vmatprep.subr.bf16.mxu0 0
    %1329 = vmatpush1.bf16.msra.mxu0 0
    %1330 = vmatprep.subr.bf16.mxu0 0
    %1331 = vmatpush1.bf16.msra.mxu0 0
    %1332 = vmatprep.subr.bf16.mxu0 0
    %1333 = vmatpush1.bf16.msra.mxu0 0
    %1334 = vmatprep.subr.bf16.mxu0 0
    %1335 = vmatpush1.bf16.msra.mxu0 0
    %1336 = vmatprep.subr.bf16.mxu0 0
    %1337 = vmatpush1.bf16.msra.mxu0 0
    %1338 = vmatprep.subr.bf16.mxu0 0
    %1339 = vmatpush1.bf16.msra.mxu0 0
    %1340 = vmatprep.subr.bf16.mxu0 0
    %1341 = vmatpush1.bf16.msra.mxu0 0
    %1342 = vmatprep.subr.bf16.mxu0 0
    %1343 = vmatpush1.bf16.msra.mxu0 0
    %1344 = vmatprep.subr.bf16.mxu0 0
    %1345 = vmatpush1.bf16.msra.mxu0 0
    %1346 = vmatprep.subr.bf16.mxu0 0
    %1347 = vmatpush1.bf16.msra.mxu0 0
    %1348 = vmatprep.subr.bf16.mxu0 0
    %1349 = vmatpush1.bf16.msra.mxu0 0
    %1350 = vmatprep.subr.bf16.mxu0 0
    %1351 = vmatpush1.bf16.msra.mxu0 0
    %1352 = vmatprep.mubr.bf16.mxu0 0
    %1353 = vmatmul.mubr.bf16.gmra.mrb[0].mxu0 %v1318
    %v1354 = vpop.f32.mrb[0].mxu0
    %v1355 = vadd.f32 0.0, %v1354
    %v1356 = vpop.f32.mrb[0].mxu0
    %v1357 = vpop.f32.mrb[0].mxu0
    %v1358 = vadd.f32 0.0, %v1357
    %v1359 = vpop.f32.mrb[0].mxu0
    %1360 = vdwg.mxu0
    %v1361 = vpack.c.bf16 %v1358, %v1355
    %v1363 = vsel %vm374, %v1361, 0
    %1365 = vmatprep.subr.bf16.mxu0 0
    %1366 = vmatpush1.bf16.msra.mxu0 %v674
    %1367 = vmatprep.subr.bf16.mxu0 0
    %1368 = vmatpush1.bf16.msra.mxu0 %v675
    %1369 = vmatprep.subr.bf16.mxu0 0
    %1370 = vmatpush1.bf16.msra.mxu0 0
    %1371 = vmatprep.subr.bf16.mxu0 0
    %1372 = vmatpush1.bf16.msra.mxu0 0
    %1373 = vmatprep.subr.bf16.mxu0 0
    %1374 = vmatpush1.bf16.msra.mxu0 0
    %1375 = vmatprep.subr.bf16.mxu0 0
    %1376 = vmatpush1.bf16.msra.mxu0 0
    %1377 = vmatprep.subr.bf16.mxu0 0
    %1378 = vmatpush1.bf16.msra.mxu0 0
    %1379 = vmatprep.subr.bf16.mxu0 0
    %1380 = vmatpush1.bf16.msra.mxu0 0
    %1381 = vmatprep.subr.bf16.mxu0 0
    %1382 = vmatpush1.bf16.msra.mxu0 0
    %1383 = vmatprep.subr.bf16.mxu0 0
    %1384 = vmatpush1.bf16.msra.mxu0 0
    %1385 = vmatprep.subr.bf16.mxu0 0
    %1386 = vmatpush1.bf16.msra.mxu0 0
    %1387 = vmatprep.subr.bf16.mxu0 0
    %1388 = vmatpush1.bf16.msra.mxu0 0
    %1389 = vmatprep.subr.bf16.mxu0 0
    %1390 = vmatpush1.bf16.msra.mxu0 0
    %1391 = vmatprep.subr.bf16.mxu0 0
    %1392 = vmatpush1.bf16.msra.mxu0 0
    %1393 = vmatprep.subr.bf16.mxu0 0
    %1394 = vmatpush1.bf16.msra.mxu0 0
    %1395 = vmatprep.subr.bf16.mxu0 0
    %1396 = vmatpush1.bf16.msra.mxu0 0
    %1397 = vmatprep.mubr.bf16.mxu0 0
    %1398 = vmatmul.mubr.bf16.gmra.mrb[0].mxu0 %v1363
    %v1399 = vpop.f32.mrb[0].mxu0
    %v1400 = vadd.f32 0.0, %v1399
    %v1401 = vpop.f32.mrb[0].mxu0
    %v1402 = vpop.f32.mrb[0].mxu0
    %v1403 = vadd.f32 0.0, %v1402
    %v1404 = vpop.f32.mrb[0].mxu0
    %1405 = vdwg.mxu0
    %v1406 = vadd.f32 %v1235, %v1400
    %v1407 = vadd.f32 %v1236, %v1403
    %1408 = vrot.lane.b32.xlu0 %v256, 64
    %v1409 = vpop.permute.xlu0 %1408
    %1410 = vrot.lane.b32.xlu0 %v266, 64
    %v1411 = vpop.permute.xlu0 %1410
    %v1413 = vsel %vm374, %v1409, 0
    %v1416 = vsel %vm374, %v1411, 0
    %1418 = vmatprep.subr.bf16.mxu0 0
    %1419 = vmatpush1.bf16.xpose.msra.mxu0 %v1416
    %1420 = vmatprep.subr.bf16.mxu0 0
    %1421 = vmatpush1.bf16.xpose.msra.mxu0 0
    %1422 = vmatprep.subr.bf16.mxu0 0
    %1423 = vmatpush1.bf16.xpose.msra.mxu0 0
    %1424 = vmatprep.subr.bf16.mxu0 0
    %1425 = vmatpush1.bf16.xpose.msra.mxu0 0
    %1426 = vmatprep.subr.bf16.mxu0 0
    %1427 = vmatpush1.bf16.xpose.msra.mxu0 0
    %1428 = vmatprep.subr.bf16.mxu0 0
    %1429 = vmatpush1.bf16.xpose.msra.mxu0 0
    %1430 = vmatprep.subr.bf16.mxu0 0
    %1431 = vmatpush1.bf16.xpose.msra.mxu0 0
    %1432 = vmatprep.subr.bf16.mxu0 0
    %1433 = vmatpush1.bf16.xpose.msra.mxu0 0
    %1434 = vmatprep.subr.bf16.mxu0 0
    %1435 = vmatpush1.bf16.xpose.msra.mxu0 0
    %1436 = vmatprep.subr.bf16.mxu0 0
    %1437 = vmatpush1.bf16.xpose.msra.mxu0 0
    %1438 = vmatprep.subr.bf16.mxu0 0
    %1439 = vmatpush1.bf16.xpose.msra.mxu0 0
    %1440 = vmatprep.subr.bf16.mxu0 0
    %1441 = vmatpush1.bf16.xpose.msra.mxu0 0
    %1442 = vmatprep.subr.bf16.mxu0 0
    %1443 = vmatpush1.bf16.xpose.msra.mxu0 0
    %1444 = vmatprep.subr.bf16.mxu0 0
    %1445 = vmatpush1.bf16.xpose.msra.mxu0 0
    %1446 = vmatprep.subr.bf16.mxu0 0
    %1447 = vmatpush1.bf16.xpose.msra.mxu0 0
    %1448 = vmatprep.subr.bf16.mxu0 0
    %1449 = vmatpush1.bf16.xpose.msra.mxu0 0
    %1450 = vmatprep.mubr.bf16.mxu0 0
    %1451 = vmatmul.mubr.bf16.gmra.mrb[0].mxu0 %v1413
    %v1452 = vpop.f32.mrb[0].mxu0
    %v1453 = vadd.f32 0.0, %v1452
    %v1454 = vpop.f32.mrb[0].mxu0
    %v1455 = vpop.f32.mrb[0].mxu0
    %v1456 = vadd.f32 0.0, %v1455
    %v1457 = vpop.f32.mrb[0].mxu0
    %1458 = vdwg.mxu0
    %v1459 = vsel %vm422, %v1453, -inf
    %1460 = vmax.xlane.f32.xlu0 %v1459
    %v1461 = vpop.xlane.xlu0 %1460
    %v1462 = vsel %vm422, %v1456, -inf
    %1463 = vmax.xlane.f32.xlu0 %v1462
    %v1464 = vpop.xlane.xlu0 %1463
    %v1465 = vsub.f32 %v1453, %v1461
    %v1466 = vsub.f32 %v1456, %v1464
    %v1467 = vmul.f32 %v1465, 1.442695
    %v1468 = vpow.pop %v1467
    %v1469 = vmul.f32 %v1466, 1.442695
    %v1470 = vpow.pop %v1469
    %v1471 = vsel %vm422, %v1468, 0.0
    %1472 = vadd.xlane.f32.xlu0 %v1471
    %v1473 = vpop.xlane.xlu0 %1472
    %v1474 = vsel %vm422, %v1470, 0.0
    %1475 = vadd.xlane.f32.xlu0 %v1474
    %v1476 = vpop.xlane.xlu0 %1475
    %v1477 = vrcp.pop %v1473
    %v1478 = vmul.f32 %v1468, %v1477
    %v1479 = vrcp.pop %v1476
    %v1480 = vmul.f32 %v1470, %v1479
    %v1481 = vpack.c.bf16 %v1480, %v1478
    %1482 = vrot.lane.b32.xlu0 %v369, 64
    %v1483 = vpop.permute.xlu0 %1482
    %v1486 = vsel %vm422, %v1481, 0
    %1488 = vmatprep.subr.bf16.mxu0 0
    %1489 = vmatpush1.bf16.msra.mxu0 %v1483
    %1490 = vmatprep.subr.bf16.mxu0 0
    %1491 = vmatpush1.bf16.msra.mxu0 0
    %1492 = vmatprep.subr.bf16.mxu0 0
    %1493 = vmatpush1.bf16.msra.mxu0 0
    %1494 = vmatprep.subr.bf16.mxu0 0
    %1495 = vmatpush1.bf16.msra.mxu0 0
    %1496 = vmatprep.subr.bf16.mxu0 0
    %1497 = vmatpush1.bf16.msra.mxu0 0
    %1498 = vmatprep.subr.bf16.mxu0 0
    %1499 = vmatpush1.bf16.msra.mxu0 0
    %1500 = vmatprep.subr.bf16.mxu0 0
    %1501 = vmatpush1.bf16.msra.mxu0 0
    %1502 = vmatprep.subr.bf16.mxu0 0
    %1503 = vmatpush1.bf16.msra.mxu0 0
    %1504 = vmatprep.subr.bf16.mxu0 0
    %1505 = vmatpush1.bf16.msra.mxu0 0
    %1506 = vmatprep.subr.bf16.mxu0 0
    %1507 = vmatpush1.bf16.msra.mxu0 0
    %1508 = vmatprep.subr.bf16.mxu0 0
    %1509 = vmatpush1.bf16.msra.mxu0 0
    %1510 = vmatprep.subr.bf16.mxu0 0
    %1511 = vmatpush1.bf16.msra.mxu0 0
    %1512 = vmatprep.subr.bf16.mxu0 0
    %1513 = vmatpush1.bf16.msra.mxu0 0
    %1514 = vmatprep.subr.bf16.mxu0 0
    %1515 = vmatpush1.bf16.msra.mxu0 0
    %1516 = vmatprep.subr.bf16.mxu0 0
    %1517 = vmatpush1.bf16.msra.mxu0 0
    %1518 = vmatprep.subr.bf16.mxu0 0
    %1519 = vmatpush1.bf16.msra.mxu0 0
    %1520 = vmatprep.mubr.bf16.mxu0 0
    %1521 = vmatmul.mubr.bf16.gmra.mrb[0].mxu0 %v1486
    %v1522 = vpop.f32.mrb[0].mxu0
    %v1523 = vadd.f32 0.0, %v1522
    %v1524 = vpop.f32.mrb[0].mxu0
    %v1525 = vpop.f32.mrb[0].mxu0
    %v1526 = vadd.f32 0.0, %v1525
    %v1527 = vpop.f32.mrb[0].mxu0
    %1528 = vdwg.mxu0
    %v1529 = vpack.c.bf16 %v1526, %v1523
    %v1531 = vsel %vm374, %v1529, 0
    %1533 = vmatprep.subr.bf16.mxu0 0
    %1534 = vmatpush1.bf16.msra.mxu0 %v850
    %1535 = vmatprep.subr.bf16.mxu0 0
    %1536 = vmatpush1.bf16.msra.mxu0 %v851
    %1537 = vmatprep.subr.bf16.mxu0 0
    %1538 = vmatpush1.bf16.msra.mxu0 0
    %1539 = vmatprep.subr.bf16.mxu0 0
    %1540 = vmatpush1.bf16.msra.mxu0 0
    %1541 = vmatprep.subr.bf16.mxu0 0
    %1542 = vmatpush1.bf16.msra.mxu0 0
    %1543 = vmatprep.subr.bf16.mxu0 0
    %1544 = vmatpush1.bf16.msra.mxu0 0
    %1545 = vmatprep.subr.bf16.mxu0 0
    %1546 = vmatpush1.bf16.msra.mxu0 0
    %1547 = vmatprep.subr.bf16.mxu0 0
    %1548 = vmatpush1.bf16.msra.mxu0 0
    %1549 = vmatprep.subr.bf16.mxu0 0
    %1550 = vmatpush1.bf16.msra.mxu0 0
    %1551 = vmatprep.subr.bf16.mxu0 0
    %1552 = vmatpush1.bf16.msra.mxu0 0
    %1553 = vmatprep.subr.bf16.mxu0 0
    %1554 = vmatpush1.bf16.msra.mxu0 0
    %1555 = vmatprep.subr.bf16.mxu0 0
    %1556 = vmatpush1.bf16.msra.mxu0 0
    %1557 = vmatprep.subr.bf16.mxu0 0
    %1558 = vmatpush1.bf16.msra.mxu0 0
    %1559 = vmatprep.subr.bf16.mxu0 0
    %1560 = vmatpush1.bf16.msra.mxu0 0
    %1561 = vmatprep.subr.bf16.mxu0 0
    %1562 = vmatpush1.bf16.msra.mxu0 0
    %1563 = vmatprep.subr.bf16.mxu0 0
    %1564 = vmatpush1.bf16.msra.mxu0 0
    %1565 = vmatprep.mubr.bf16.mxu0 0
    %1566 = vmatmul.mubr.bf16.gmra.mrb[0].mxu0 %v1531
    %v1567 = vpop.f32.mrb[0].mxu0
    %v1568 = vadd.f32 0.0, %v1567
    %v1569 = vpop.f32.mrb[0].mxu0
    %v1570 = vpop.f32.mrb[0].mxu0
    %v1571 = vadd.f32 0.0, %v1570
    %v1572 = vpop.f32.mrb[0].mxu0
    %1573 = vdwg.mxu0
    %v1574 = vadd.f32 %v1406, %v1568
    %v1575 = vadd.f32 %v1407, %v1571
    %1576 = vrot.lane.b32.xlu0 %v256, 32
    %v1577 = vpop.permute.xlu0 %1576
    %1578 = vrot.lane.b32.xlu0 %v266, 32
    %v1579 = vpop.permute.xlu0 %1578
    %v1581 = vsel %vm374, %v1577, 0
    %v1584 = vsel %vm374, %v1579, 0
    %1586 = vmatprep.subr.bf16.mxu0 0
    %1587 = vmatpush1.bf16.xpose.msra.mxu0 %v1584
    %1588 = vmatprep.subr.bf16.mxu0 0
    %1589 = vmatpush1.bf16.xpose.msra.mxu0 0
    %1590 = vmatprep.subr.bf16.mxu0 0
    %1591 = vmatpush1.bf16.xpose.msra.mxu0 0
    %1592 = vmatprep.subr.bf16.mxu0 0
    %1593 = vmatpush1.bf16.xpose.msra.mxu0 0
    %1594 = vmatprep.subr.bf16.mxu0 0
    %1595 = vmatpush1.bf16.xpose.msra.mxu0 0
    %1596 = vmatprep.subr.bf16.mxu0 0
    %1597 = vmatpush1.bf16.xpose.msra.mxu0 0
    %1598 = vmatprep.subr.bf16.mxu0 0
    %1599 = vmatpush1.bf16.xpose.msra.mxu0 0
    %1600 = vmatprep.subr.bf16.mxu0 0
    %1601 = vmatpush1.bf16.xpose.msra.mxu0 0
    %1602 = vmatprep.subr.bf16.mxu0 0
    %1603 = vmatpush1.bf16.xpose.msra.mxu0 0
    %1604 = vmatprep.subr.bf16.mxu0 0
    %1605 = vmatpush1.bf16.xpose.msra.mxu0 0
    %1606 = vmatprep.subr.bf16.mxu0 0
    %1607 = vmatpush1.bf16.xpose.msra.mxu0 0
    %1608 = vmatprep.subr.bf16.mxu0 0
    %1609 = vmatpush1.bf16.xpose.msra.mxu0 0
    %1610 = vmatprep.subr.bf16.mxu0 0
    %1611 = vmatpush1.bf16.xpose.msra.mxu0 0
    %1612 = vmatprep.subr.bf16.mxu0 0
    %1613 = vmatpush1.bf16.xpose.msra.mxu0 0
    %1614 = vmatprep.subr.bf16.mxu0 0
    %1615 = vmatpush1.bf16.xpose.msra.mxu0 0
    %1616 = vmatprep.subr.bf16.mxu0 0
    %1617 = vmatpush1.bf16.xpose.msra.mxu0 0
    %1618 = vmatprep.mubr.bf16.mxu0 0
    %1619 = vmatmul.mubr.bf16.gmra.mrb[0].mxu0 %v1581
    %v1620 = vpop.f32.mrb[0].mxu0
    %v1621 = vadd.f32 0.0, %v1620
    %v1622 = vpop.f32.mrb[0].mxu0
    %v1623 = vpop.f32.mrb[0].mxu0
    %v1624 = vadd.f32 0.0, %v1623
    %v1625 = vpop.f32.mrb[0].mxu0
    %1626 = vdwg.mxu0
    %v1627 = vsel %vm422, %v1621, -inf
    %1628 = vmax.xlane.f32.xlu0 %v1627
    %v1629 = vpop.xlane.xlu0 %1628
    %v1630 = vsel %vm422, %v1624, -inf
    %1631 = vmax.xlane.f32.xlu0 %v1630
    %v1632 = vpop.xlane.xlu0 %1631
    %v1633 = vsub.f32 %v1621, %v1629
    %v1634 = vsub.f32 %v1624, %v1632
    %v1635 = vmul.f32 %v1633, 1.442695
    %v1636 = vpow.pop %v1635
    %v1637 = vmul.f32 %v1634, 1.442695
    %v1638 = vpow.pop %v1637
    %v1639 = vsel %vm422, %v1636, 0.0
    %1640 = vadd.xlane.f32.xlu0 %v1639
    %v1641 = vpop.xlane.xlu0 %1640
    %v1642 = vsel %vm422, %v1638, 0.0
    %1643 = vadd.xlane.f32.xlu0 %v1642
    %v1644 = vpop.xlane.xlu0 %1643
    %v1645 = vrcp.pop %v1641
    %v1646 = vmul.f32 %v1636, %v1645
    %v1647 = vrcp.pop %v1644
    %v1648 = vmul.f32 %v1638, %v1647
    %v1649 = vpack.c.bf16 %v1648, %v1646
    %1650 = vrot.lane.b32.xlu0 %v369, 32
    %v1651 = vpop.permute.xlu0 %1650
    %v1654 = vsel %vm422, %v1649, 0
    %1656 = vmatprep.subr.bf16.mxu0 0
    %1657 = vmatpush1.bf16.msra.mxu0 %v1651
    %1658 = vmatprep.subr.bf16.mxu0 0
    %1659 = vmatpush1.bf16.msra.mxu0 0
    %1660 = vmatprep.subr.bf16.mxu0 0
    %1661 = vmatpush1.bf16.msra.mxu0 0
    %1662 = vmatprep.subr.bf16.mxu0 0
    %1663 = vmatpush1.bf16.msra.mxu0 0
    %1664 = vmatprep.subr.bf16.mxu0 0
    %1665 = vmatpush1.bf16.msra.mxu0 0
    %1666 = vmatprep.subr.bf16.mxu0 0
    %1667 = vmatpush1.bf16.msra.mxu0 0
    %1668 = vmatprep.subr.bf16.mxu0 0
    %1669 = vmatpush1.bf16.msra.mxu0 0
    %1670 = vmatprep.subr.bf16.mxu0 0
    %1671 = vmatpush1.bf16.msra.mxu0 0
    %1672 = vmatprep.subr.bf16.mxu0 0
    %1673 = vmatpush1.bf16.msra.mxu0 0
    %1674 = vmatprep.subr.bf16.mxu0 0
    %1675 = vmatpush1.bf16.msra.mxu0 0
    %1676 = vmatprep.subr.bf16.mxu0 0
    %1677 = vmatpush1.bf16.msra.mxu0 0
    %1678 = vmatprep.subr.bf16.mxu0 0
    %1679 = vmatpush1.bf16.msra.mxu0 0
    %1680 = vmatprep.subr.bf16.mxu0 0
    %1681 = vmatpush1.bf16.msra.mxu0 0
    %1682 = vmatprep.subr.bf16.mxu0 0
    %1683 = vmatpush1.bf16.msra.mxu0 0
    %1684 = vmatprep.subr.bf16.mxu0 0
    %1685 = vmatpush1.bf16.msra.mxu0 0
    %1686 = vmatprep.subr.bf16.mxu0 0
    %1687 = vmatpush1.bf16.msra.mxu0 0
    %1688 = vmatprep.mubr.bf16.mxu0 0
    %1689 = vmatmul.mubr.bf16.gmra.mrb[0].mxu0 %v1654
    %v1690 = vpop.f32.mrb[0].mxu0
    %v1691 = vadd.f32 0.0, %v1690
    %v1692 = vpop.f32.mrb[0].mxu0
    %v1693 = vpop.f32.mrb[0].mxu0
    %v1694 = vadd.f32 0.0, %v1693
    %v1695 = vpop.f32.mrb[0].mxu0
    %1696 = vdwg.mxu0
    %v1697 = vpack.c.bf16 %v1694, %v1691
    %v1699 = vsel %vm374, %v1697, 0
    %1701 = vmatprep.subr.bf16.mxu0 0
    %1702 = vmatpush1.bf16.msra.mxu0 %v1026
    %1703 = vmatprep.subr.bf16.mxu0 0
    %1704 = vmatpush1.bf16.msra.mxu0 %v1027
    %1705 = vmatprep.subr.bf16.mxu0 0
    %1706 = vmatpush1.bf16.msra.mxu0 0
    %1707 = vmatprep.subr.bf16.mxu0 0
    %1708 = vmatpush1.bf16.msra.mxu0 0
    %1709 = vmatprep.subr.bf16.mxu0 0
    %1710 = vmatpush1.bf16.msra.mxu0 0
    %1711 = vmatprep.subr.bf16.mxu0 0
    %1712 = vmatpush1.bf16.msra.mxu0 0
    %1713 = vmatprep.subr.bf16.mxu0 0
    %1714 = vmatpush1.bf16.msra.mxu0 0
    %1715 = vmatprep.subr.bf16.mxu0 0
    %1716 = vmatpush1.bf16.msra.mxu0 0
    %1717 = vmatprep.subr.bf16.mxu0 0
    %1718 = vmatpush1.bf16.msra.mxu0 0
    %1719 = vmatprep.subr.bf16.mxu0 0
    %1720 = vmatpush1.bf16.msra.mxu0 0
    %1721 = vmatprep.subr.bf16.mxu0 0
    %1722 = vmatpush1.bf16.msra.mxu0 0
    %1723 = vmatprep.subr.bf16.mxu0 0
    %1724 = vmatpush1.bf16.msra.mxu0 0
    %1725 = vmatprep.subr.bf16.mxu0 0
    %1726 = vmatpush1.bf16.msra.mxu0 0
    %1727 = vmatprep.subr.bf16.mxu0 0
    %1728 = vmatpush1.bf16.msra.mxu0 0
    %1729 = vmatprep.subr.bf16.mxu0 0
    %1730 = vmatpush1.bf16.msra.mxu0 0
    %1731 = vmatprep.subr.bf16.mxu0 0
    %1732 = vmatpush1.bf16.msra.mxu0 0
    %1733 = vmatprep.mubr.bf16.mxu0 0
    %1734 = vmatmul.mubr.bf16.gmra.mrb[0].mxu0 %v1699
    %v1735 = vpop.f32.mrb[0].mxu0
    %v1736 = vadd.f32 0.0, %v1735
    %v1737 = vpop.f32.mrb[0].mxu0
    %v1738 = vpop.f32.mrb[0].mxu0
    %v1739 = vadd.f32 0.0, %v1738
    %v1740 = vpop.f32.mrb[0].mxu0
    %1741 = vdwg.mxu0
    %v1742 = vadd.f32 %v1574, %v1736
    %v1743 = vadd.f32 %v1575, %v1739
    %v1744 = vadd.f32 %v60, %v1074
    %v1745 = vadd.f32 %v61, %v1075
    %v1746 = vadd.f32 %v62, %v1742
    %v1747 = vadd.f32 %v63, %v1743
    %1748 = vadd.xlane.f32.xlu0 %v1744
    %v1749 = vpop.xlane.xlu0 %1748
    %1750 = vadd.xlane.f32.xlu0 %v1745
    %v1751 = vpop.xlane.xlu0 %1750
    %1752 = vadd.xlane.f32.xlu0 %v1746
    %v1753 = vpop.xlane.xlu0 %1752
    %1754 = vadd.xlane.f32.xlu0 %v1747
    %v1755 = vpop.xlane.xlu0 %1754
    %v1756 = vrcp.pop 128.0
    %v1757 = vmul.f32 %v1749, %v1756
    %v1758 = vmul.f32 %v1751, %v1756
    %v1759 = vmul.f32 %v1753, %v1756
    %v1760 = vmul.f32 %v1755, %v1756
    %v1761 = vsub.f32 %v1744, %v1757
    %v1762 = vsub.f32 %v1745, %v1758
    %v1763 = vsub.f32 %v1746, %v1759
    %v1764 = vsub.f32 %v1747, %v1760
    %v1765 = vmul.f32 %v1761, %v1761
    %v1766 = vmul.f32 %v1762, %v1762
    %v1767 = vmul.f32 %v1763, %v1763
    %v1768 = vmul.f32 %v1764, %v1764
    %1769 = vadd.xlane.f32.xlu0 %v1765
    %v1770 = vpop.xlane.xlu0 %1769
    %1771 = vadd.xlane.f32.xlu0 %v1766
    %v1772 = vpop.xlane.xlu0 %1771
    %1773 = vadd.xlane.f32.xlu0 %v1767
    %v1774 = vpop.xlane.xlu0 %1773
    %1775 = vadd.xlane.f32.xlu0 %v1768
    %v1776 = vpop.xlane.xlu0 %1775
    %v1777 = vmul.f32 %v1770, %v1756
    %v1778 = vmul.f32 %v1772, %v1756
    %v1779 = vmul.f32 %v1774, %v1756
    %v1780 = vmul.f32 %v1776, %v1756
    %v1781 = vadd.f32 %v1777, 1e-05
    %v1782 = vadd.f32 %v1778, 1e-05
    %v1783 = vadd.f32 %v1779, 1e-05
    %v1784 = vadd.f32 %v1780, 1e-05
    %v1785 = vrsqrt.pop %v1781
    %v1786 = vrsqrt.pop %v1782
    %v1787 = vrsqrt.pop %v1783
    %v1788 = vrsqrt.pop %v1784
    %v1789 = vmul.f32 %v1761, %v1785
    %v1790 = vmul.f32 %v1762, %v1786
    %v1791 = vmul.f32 %v1763, %v1787
    %v1792 = vmul.f32 %v1764, %v1788
    %v1793 = vlaneseq
    %v1794 = vshrl.u32 %v1793, 7
    %v1795 = vsub.s32 0, %v1794
    %v1796 = vrot.slane %v108, %v1795
    %v1797 = vmul.f32 %v1789, %v1796
    %v1798 = vmul.f32 %v1790, %v1796
    %v1799 = vmul.f32 %v1791, %v1796
    %v1800 = vmul.f32 %v1792, %v1796
    %v1801 = vlaneseq
    %v1802 = vshrl.u32 %v1801, 7
    %v1803 = vsub.s32 0, %v1802
    %v1804 = vrot.slane %v109, %v1803
    %v1805 = vadd.f32 %v1797, %v1804
    %v1806 = vadd.f32 %v1798, %v1804
    %v1807 = vadd.f32 %v1799, %v1804
    %v1808 = vadd.f32 %v1800, %v1804
    %1809 = vst [vmem:[#allocation8] sm:$0xff] %v1805
    %1810 = vst [vmem:[#allocation8 + $0x8] sm:$0xff] %v1806
    %1811 = vst [vmem:[#allocation8 + $0x10] sm:$0xff] %v1807
    %1812 = vst [vmem:[#allocation8 + $0x18] sm:$0xff] %v1808
    // Predicated region
    $region30: #{self_attention_layer.1} parent=1 // pred_check
      _
    $region31: #{self_attention_layer.1} parent=1 // pred_check_branch
      %1814 = sbr.rel (0) target = $region33
    $region32: #{self_attention_layer.1} parent=1 // pred_region
      %s1816 = ssub.s32 512, 512
      %1817 = vsyncadd [#allocation4], %s1816
      %s1818 = sshll.u32 [#allocation8], 4
      %s1819 = int_to_ptr.vmem [resolvable:$true] %s1818
      %1824 = dma.vmem_to_hbm [thread:$0]  %s1819, 512, %s4, [#allocation4], 128, 128, 8
    $region33: #{self_attention_layer.1} parent=1 // pred_fallthru
      _
    // Predicated region
    $region34: #{self_attention_layer.1} parent=1 // pred_check
      _
    $region35: #{self_attention_layer.1} parent=1 // pred_check_branch
      %1826 = sbr.rel (0) target = $region37
    $region36: #{self_attention_layer.1} parent=1 // pred_region
      %1827 = dma.done [#allocation4], 512
    $region37: #{self_attention_layer.1} parent=1 // pred_fallthru
      _
    %1828 = vsyncpa [#allocation3], 1
    %1829 = vsyncpa [#allocation6], 1
    %1830 = vsyncpa [#allocation4], 1

</llo_original>
